<compile_context>
chip_gen: v6e
topology: v6e:2x2x1
jax: 0.10.0
libtpu: 0.0.40
codegen_flags: <defaults>
</compile_context>

<pallas_src>
import functools

import jax
import jax.numpy as jnp
from jax.experimental import pallas as pl
from jax.experimental.pallas import tpu as pltpu

# ----------------------------- problem sizes -----------------------------
# The module hard-codes 512 in class_feature.reshape(..., -1, 512), so ctx_dim /
# vis_dim stay at 512 (CLIP ViT-B). Other dims kept small.
N_CLS   = 8                    # number of class names
N_CTX   = 4                    # number of context tokens ("X X X X")
SEQ     = 77                   # CLIP tokenized prompt length
CTX_DIM = 512                  # clip_model.ln_final.weight.shape[0]
VIS_DIM = 512                  # clip_model.visual.output_dim
HIDDEN  = VIS_DIM // 4         # meta_net linear1 output
OUT_DIM = 4 * CTX_DIM          # meta_net linear2 output
N_SUF   = SEQ - 1 - N_CTX      # suffix token count (72)
DTYPE   = jnp.float32


# ------------------------------- kernel ----------------------------------
def _prompt_learner_kernel(tf_ref, w1_ref, b1_ref, w2_ref, b2_ref,
                           prefix_ref, ctx_ref, suffix_ref,
                           prompt_ref, feat_ref):
    # ---- meta_net MLP: Linear -> QuickGELU -> Linear (MXU + EUP) ----
    x = tf_ref[...]                                           # (n_cls, vis_dim)
    h = jnp.dot(x, w1_ref[...], preferred_element_type=jnp.float32) + b1_ref[...]
    h = h * jax.nn.sigmoid(1.702 * h)                         # QuickGELU
    y = jnp.dot(h, w2_ref[...], preferred_element_type=jnp.float32) + b2_ref[...]
    feat_ref[...] = y.astype(feat_ref.dtype)                  # (n_cls, out_blk)

    # ---- prompt assembly: direct slice stores (no concat intermediate) ----
    n_cls  = prefix_ref.shape[0]
    n_ctx  = ctx_ref.shape[0]
    lane   = ctx_ref.shape[1]                                 # ctx_dim block width
    prompt_ref[:, 0:1, :]          = prefix_ref[...]
    prompt_ref[:, 1:1 + n_ctx, :]  = jnp.broadcast_to(
        ctx_ref[...][None, :, :], (n_cls, n_ctx, lane))
    prompt_ref[:, 1 + n_ctx:, :]   = suffix_ref[...]


# ------------------------------ wrapper -----------------------------------
def _num_lane_blocks() -> int:
    """2-way lane split only when the chip has 2 TensorCores (v7x)."""
    try:
        kind = jax.devices()[0].device_kind.lower()
    except Exception:
        return 1
    return 2 if "v7" in kind else 1


@functools.partial(jax.jit, static_argnames=("num_blocks",))
def prompt_learner_forward(text_features, w1, b1, w2, b2, prefix, ctx, suffix,
                           *, num_blocks=1):
    lane_blk = CTX_DIM // num_blocks      # multiple of 128 for num_blocks in {1, 2}
    out_blk  = OUT_DIM // num_blocks

    prompt, class_feature = pl.pallas_call(
        _prompt_learner_kernel,
        out_shape=(
            jax.ShapeDtypeStruct((N_CLS, SEQ, CTX_DIM), DTYPE),   # prompt
            jax.ShapeDtypeStruct((N_CLS, OUT_DIM), DTYPE),        # class_feature (flat)
        ),
        grid=(num_blocks,),
        in_specs=[
            pl.BlockSpec((N_CLS, VIS_DIM),         lambda i: (0, 0)),      # text_features
            pl.BlockSpec((VIS_DIM, HIDDEN),        lambda i: (0, 0)),      # w1
            pl.BlockSpec((1, HIDDEN),              lambda i: (0, 0)),      # b1
            pl.BlockSpec((HIDDEN, out_blk),        lambda i: (0, i)),      # w2 (col split)
            pl.BlockSpec((1, out_blk),             lambda i: (0, i)),      # b2
            pl.BlockSpec((N_CLS, 1, lane_blk),     lambda i: (0, 0, i)),   # token_prefix
            pl.BlockSpec((N_CTX, lane_blk),        lambda i: (0, i)),      # ctx
            pl.BlockSpec((N_CLS, N_SUF, lane_blk), lambda i: (0, 0, i)),   # token_suffix
        ],
        out_specs=(
            pl.BlockSpec((N_CLS, SEQ, lane_blk),   lambda i: (0, 0, i)),   # prompt
            pl.BlockSpec((N_CLS, out_blk),         lambda i: (0, i)),      # class_feature
        ),
        compiler_params=pltpu.CompilerParams(
            dimension_semantics=("parallel",)),
    )(text_features, w1, b1, w2, b2, prefix, ctx, suffix)

    # Glue (plain JAX): the module's hard-coded reshape(..., -1, 512).
    class_feature = class_feature.reshape(class_feature.shape[0], -1, 512)
    return prompt, class_feature


# ------------------------- pure-JAX reference ------------------------------
def reference_forward(text_features, w1, b1, w2, b2, prefix, ctx, suffix):
    h = text_features @ w1 + b1
    h = h * jax.nn.sigmoid(1.702 * h)
    cf = h @ w2 + b2
    cf = cf.reshape(cf.shape[0], -1, 512)
    ctx_e = jnp.broadcast_to(ctx[None, :, :], (N_CLS, N_CTX, CTX_DIM))
    prompt = jnp.concatenate([prefix, ctx_e, suffix], axis=1)
    return prompt, cf


# ----------------------------- parameter init ------------------------------
def make_params(key):
    ks = jax.random.split(key, 8)
    # Synthetic stand-ins for CLIP-derived buffers (no checkpoint loading).
    tf = jax.random.normal(ks[0], (N_CLS, VIS_DIM), DTYPE)
    text_features = tf / jnp.linalg.norm(tf, axis=-1, keepdims=True)   # pre-normalized
    # meta_net: Linear(vis, vis//4) -> QuickGELU -> Linear(vis//4, 4*ctx_dim)
    # NOTE: weights stored (in, out) — PyTorch nn.Linear.weight transposed.
    w1 = jax.random.normal(ks[1], (VIS_DIM, HIDDEN), DTYPE) * 0.02
    b1 = jax.random.normal(ks[2], (1, HIDDEN), DTYPE) * 0.01
    w2 = jax.random.normal(ks[3], (HIDDEN, OUT_DIM), DTYPE) * 0.02
    b2 = jax.random.normal(ks[4], (1, OUT_DIM), DTYPE) * 0.01
    # token_prefix / token_suffix: slices of CLIP token embeddings (synthetic here)
    prefix = jax.random.normal(ks[5], (N_CLS, 1, CTX_DIM), DTYPE) * 0.02
    suffix = jax.random.normal(ks[6], (N_CLS, N_SUF, CTX_DIM), DTYPE) * 0.02
    # ctx: nn.init.normal_(std=0.02), generic (not class-specific) context
    ctx = jax.random.normal(ks[7], (N_CTX, CTX_DIM), DTYPE) * 0.02
    return text_features, w1, b1, w2, b2, prefix, ctx, suffix


if __name__ == "__main__":
    args = make_params(jax.random.PRNGKey(0))
    num_blocks = _num_lane_blocks()   # 2 on v7x (2 TCs), 1 on v5e/v6e

    prompt, class_feature = prompt_learner_forward(*args, num_blocks=num_blocks)
    jax.block_until_ready((prompt, class_feature))

    prompt_ref, cf_ref = reference_forward(*args)
    assert prompt.shape == (N_CLS, SEQ, CTX_DIM)
    assert class_feature.shape == (N_CLS, OUT_DIM // 512, 512)
    assert jnp.allclose(prompt, prompt_ref, atol=1e-5, rtol=1e-5)
    assert jnp.allclose(class_feature, cf_ref, atol=1e-4, rtol=1e-4)

    print("KERNEL_OK")
</pallas_src>

<mosaic_0001>
module attributes {stable_mosaic.version = 11 : i64} {
  func.func @_prompt_learner_kernel(%arg0: i32, %arg1: memref<8x512xf32, #tpu.memory_space<vmem>>, %arg2: memref<512x128xf32, #tpu.memory_space<vmem>>, %arg3: memref<1x128xf32, #tpu.memory_space<vmem>>, %arg4: memref<128x2048xf32, #tpu.memory_space<vmem>>, %arg5: memref<1x2048xf32, #tpu.memory_space<vmem>>, %arg6: memref<8x1x512xf32, #tpu.memory_space<vmem>>, %arg7: memref<4x512xf32, #tpu.memory_space<vmem>>, %arg8: memref<8x72x512xf32, #tpu.memory_space<vmem>>, %arg9: memref<8x77x512xf32, #tpu.memory_space<vmem>>, %arg10: memref<8x2048xf32, #tpu.memory_space<vmem>>) attributes {dimension_semantics = [#tpu.dimension_semantics<parallel>], iteration_bounds = array<i64: 1>, scalar_prefetch = 0 : i64, scratch_operands = 0 : i64, tpu.core_type = #tpu.core_type<tc>, window_params = [{pipeline_mode = #tpu.pipeline_mode<synchronous>, transform_indices = @transform_0, window_bounds = array<i64: 8, 512>}, {pipeline_mode = #tpu.pipeline_mode<synchronous>, transform_indices = @transform_1, window_bounds = array<i64: 512, 128>}, {pipeline_mode = #tpu.pipeline_mode<synchronous>, transform_indices = @transform_2, window_bounds = array<i64: 1, 128>}, {transform_indices = @transform_3, window_bounds = array<i64: 128, 2048>}, {transform_indices = @transform_4, window_bounds = array<i64: 1, 2048>}, {transform_indices = @transform_5, window_bounds = array<i64: 8, 1, 512>}, {transform_indices = @transform_6, window_bounds = array<i64: 4, 512>}, {transform_indices = @transform_7, window_bounds = array<i64: 8, 72, 512>}, {transform_indices = @transform_8, window_bounds = array<i64: 8, 77, 512>}, {transform_indices = @transform_9, window_bounds = array<i64: 8, 2048>}]} {
    %c0 = arith.constant 0 : index
    %c0_0 = arith.constant 0 : index
    %0 = vector.load %arg1[%c0, %c0_0] : memref<8x512xf32, #tpu.memory_space<vmem>>, vector<8x512xf32>
    %c0_1 = arith.constant 0 : index
    %c0_2 = arith.constant 0 : index
    %1 = vector.load %arg2[%c0_1, %c0_2] : memref<512x128xf32, #tpu.memory_space<vmem>>, vector<512x128xf32>
    %cst = arith.constant dense<0.000000e+00> : vector<8x128xf32>
    %2 = tpu.matmul %0, %1, %cst {dimension_numbers = #tpu.dot_dimension_numbers<[1], [0], [0], [1], [0, 0, 1, 1], [], []>} : vector<8x512xf32>, vector<512x128xf32>, vector<8x128xf32> -> vector<8x128xf32>
    %c0_3 = arith.constant 0 : index
    %c0_4 = arith.constant 0 : index
    %3 = vector.load %arg3[%c0_3, %c0_4] : memref<1x128xf32, #tpu.memory_space<vmem>>, vector<1x128xf32>
    %4 = vector.broadcast %3 : vector<1x128xf32> to vector<8x128xf32>
    %5 = arith.addf %2, %4 : vector<8x128xf32>
    %cst_5 = arith.constant 1.702000e+00 : f32
    %6 = vector.broadcast %cst_5 : f32 to vector<8x128xf32>
    %7 = arith.mulf %6, %5 : vector<8x128xf32>
    %8 = arith.negf %7 : vector<8x128xf32>
    %9 = math.exp %8 : vector<8x128xf32>
    %cst_6 = arith.constant 1.000000e+00 : f32
    %10 = vector.broadcast %cst_6 : f32 to vector<8x128xf32>
    %11 = arith.addf %10, %9 : vector<8x128xf32>
    %12 = arith.divf %10, %11 : vector<8x128xf32>
    %13 = arith.mulf %5, %12 : vector<8x128xf32>
    %c0_7 = arith.constant 0 : index
    %c0_8 = arith.constant 0 : index
    %14 = vector.load %arg4[%c0_7, %c0_8] : memref<128x2048xf32, #tpu.memory_space<vmem>>, vector<128x2048xf32>
    %cst_9 = arith.constant dense<0.000000e+00> : vector<8x2048xf32>
    %15 = tpu.matmul %13, %14, %cst_9 {dimension_numbers = #tpu.dot_dimension_numbers<[1], [0], [0], [1], [0, 0, 1, 1], [], []>} : vector<8x128xf32>, vector<128x2048xf32>, vector<8x2048xf32> -> vector<8x2048xf32>
    %c0_10 = arith.constant 0 : index
    %c0_11 = arith.constant 0 : index
    %16 = vector.load %arg5[%c0_10, %c0_11] : memref<1x2048xf32, #tpu.memory_space<vmem>>, vector<1x2048xf32>
    %17 = vector.broadcast %16 : vector<1x2048xf32> to vector<8x2048xf32>
    %18 = arith.addf %15, %17 : vector<8x2048xf32>
    %c0_12 = arith.constant 0 : index
    %c0_13 = arith.constant 0 : index
    %19 = vector.load %arg10[%c0_12, %c0_13] : memref<8x2048xf32, #tpu.memory_space<vmem>>, vector<8x2048xf32>
    tpu.vector_store %arg10[%c0_12, %c0_13], %18 {strides = array<i32>} : memref<8x2048xf32, #tpu.memory_space<vmem>>, vector<8x2048xf32>,
    %c0_14 = arith.constant 0 : index
    %c0_15 = arith.constant 0 : index
    %c0_16 = arith.constant 0 : index
    %20 = vector.load %arg6[%c0_14, %c0_15, %c0_16] : memref<8x1x512xf32, #tpu.memory_space<vmem>>, vector<8x1x512xf32>
    %c0_17 = arith.constant 0 : index
    %c0_18 = arith.constant 0 : index
    %c0_19 = arith.constant 0 : index
    %21 = vector.load %arg9[%c0_17, %c0_18, %c0_19] : memref<8x77x512xf32, #tpu.memory_space<vmem>>, vector<8x1x512xf32>
    tpu.vector_store %arg9[%c0_17, %c0_18, %c0_19], %20 {strides = array<i32>} : memref<8x77x512xf32, #tpu.memory_space<vmem>>, vector<8x1x512xf32>,
    %c0_20 = arith.constant 0 : index
    %c0_21 = arith.constant 0 : index
    %22 = vector.load %arg7[%c0_20, %c0_21] : memref<4x512xf32, #tpu.memory_space<vmem>>, vector<4x512xf32>
    %23 = vector.shape_cast %22 : vector<4x512xf32> to vector<1x4x512xf32>
    %24 = vector.shape_cast %23 : vector<1x4x512xf32> to vector<1x4x512xf32>
    %25 = vector.broadcast %24 : vector<1x4x512xf32> to vector<8x4x512xf32>
    %c0_22 = arith.constant 0 : index
    %c1 = arith.constant 1 : index
    %c0_23 = arith.constant 0 : index
    %26 = vector.load %arg9[%c0_22, %c1, %c0_23] : memref<8x77x512xf32, #tpu.memory_space<vmem>>, vector<8x4x512xf32>
    tpu.vector_store %arg9[%c0_22, %c1, %c0_23], %25 {strides = array<i32>} : memref<8x77x512xf32, #tpu.memory_space<vmem>>, vector<8x4x512xf32>,
    %c0_24 = arith.constant 0 : index
    %c0_25 = arith.constant 0 : index
    %c0_26 = arith.constant 0 : index
    %27 = vector.load %arg8[%c0_24, %c0_25, %c0_26] : memref<8x72x512xf32, #tpu.memory_space<vmem>>, vector<8x72x512xf32>
    %c0_27 = arith.constant 0 : index
    %c5 = arith.constant 5 : index
    %c0_28 = arith.constant 0 : index
    %28 = vector.load %arg9[%c0_27, %c5, %c0_28] : memref<8x77x512xf32, #tpu.memory_space<vmem>>, vector<8x72x512xf32>
    tpu.vector_store %arg9[%c0_27, %c5, %c0_28], %27 {strides = array<i32>} : memref<8x77x512xf32, #tpu.memory_space<vmem>>, vector<8x72x512xf32>,
    return
  }
  func.func @transform_0(%arg0: i32) -> (i32, i32) {
    %c0_i32 = arith.constant 0 : i32
    %c0_i32_0 = arith.constant 0 : i32
    %c0_i32_1 = arith.constant 0 : i32
    return %c0_i32, %c0_i32_0 : i32, i32
  }
  func.func @transform_1(%arg0: i32) -> (i32, i32) {
    %c0_i32 = arith.constant 0 : i32
    %c0_i32_0 = arith.constant 0 : i32
    %c0_i32_1 = arith.constant 0 : i32
    return %c0_i32, %c0_i32_0 : i32, i32
  }
  func.func @transform_2(%arg0: i32) -> (i32, i32) {
    %c0_i32 = arith.constant 0 : i32
    %c0_i32_0 = arith.constant 0 : i32
    %c0_i32_1 = arith.constant 0 : i32
    return %c0_i32, %c0_i32_0 : i32, i32
  }
  func.func @transform_3(%arg0: i32) -> (i32, i32) {
    %c0_i32 = arith.constant 0 : i32
    %c0_i32_0 = arith.constant 0 : i32
    return %c0_i32, %arg0 : i32, i32
  }
  func.func @transform_4(%arg0: i32) -> (i32, i32) {
    %c0_i32 = arith.constant 0 : i32
    %c0_i32_0 = arith.constant 0 : i32
    return %c0_i32, %arg0 : i32, i32
  }
  func.func @transform_5(%arg0: i32) -> (i32, i32, i32) {
    %c0_i32 = arith.constant 0 : i32
    %c0_i32_0 = arith.constant 0 : i32
    %c0_i32_1 = arith.constant 0 : i32
    return %c0_i32, %c0_i32_0, %arg0 : i32, i32, i32
  }
  func.func @transform_6(%arg0: i32) -> (i32, i32) {
    %c0_i32 = arith.constant 0 : i32
    %c0_i32_0 = arith.constant 0 : i32
    return %c0_i32, %arg0 : i32, i32
  }
  func.func @transform_7(%arg0: i32) -> (i32, i32, i32) {
    %c0_i32 = arith.constant 0 : i32
    %c0_i32_0 = arith.constant 0 : i32
    %c0_i32_1 = arith.constant 0 : i32
    return %c0_i32, %c0_i32_0, %arg0 : i32, i32, i32
  }
  func.func @transform_8(%arg0: i32) -> (i32, i32, i32) {
    %c0_i32 = arith.constant 0 : i32
    %c0_i32_0 = arith.constant 0 : i32
    %c0_i32_1 = arith.constant 0 : i32
    return %c0_i32, %c0_i32_0, %arg0 : i32, i32, i32
  }
  func.func @transform_9(%arg0: i32) -> (i32, i32) {
    %c0_i32 = arith.constant 0 : i32
    %c0_i32_0 = arith.constant 0 : i32
    return %c0_i32, %arg0 : i32, i32
  }
}

</mosaic_0001>

<llo_original>
// kernel: prompt_learner_forward.1
$region0: #{prompt_learner_forward.1}
  #allocation0 [shape = 'u32[]', space=smem, size = 0x4, offset = 0x4, fixed_abs, tag = 'smem constant byte address 0x4 - core index']
  #allocation1 [shape = 'u32[144,128]{1,0:T(1,128)}', space=vmem, size = 0x12000, scoped, tag = 'internal scratch']
  %s0 = inlined_call_operand.hbm [shape: f32[8,512], index: 0, kind: input, shape index: {}]
  %s1 = inlined_call_operand.hbm [shape: f32[512,128], index: 1, kind: input, shape index: {}]
  %s2 = inlined_call_operand.hbm [shape: f32[1,128], index: 2, kind: input, shape index: {}]
  %s3 = inlined_call_operand.hbm [shape: f32[128,2048], index: 3, kind: input, shape index: {}]
  %s4 = inlined_call_operand.hbm [shape: f32[1,2048], index: 4, kind: input, shape index: {}]
  %s5 = inlined_call_operand.hbm [shape: f32[8,1,512], index: 5, kind: input, shape index: {}]
  %s6 = inlined_call_operand.hbm [shape: f32[4,512], index: 6, kind: input, shape index: {}]
  %s7 = inlined_call_operand.hbm [shape: f32[8,72,512], index: 7, kind: input, shape index: {}]
  %s8 = inlined_call_operand.vmem [shape: f32[8,77,512], index: 8, kind: output, shape index: {0}]
  %s9 = inlined_call_operand.vmem [shape: f32[8,2048], index: 9, kind: output, shape index: {1}]
  %10 = xla_tuple %s8, %s9
  %s11 = sld [smem:[#allocation0]]
  $region82: #{prompt_learner_forward.1} parent=0
    _
  %s13 = ssub.s32 1, %s11
  %s14 = scalar_select 0, %s13, %s11
  $region1: #{prompt_learner_forward.1} parent=0
    #allocation2 [shape = 'u8[16384]{0}', space=vmem, size = 0x4000, scoped, tag = 'input window, operand 0, single buffered']
    #allocation3 [shape = 's32[1]{0}', space=sflag, size = 0x4, scoped, tag = 'scoped memory for prompt_learner_forward.1']
    #allocation4 [shape = 'u8[262144]{0}', space=vmem, size = 0x40000, scoped, tag = 'input window, operand 1, single buffered']
    #allocation5 [shape = 's32[1]{0}', space=sflag, size = 0x4, scoped, tag = 'scoped memory for prompt_learner_forward.1']
    #allocation6 [shape = 'u8[512]{0}', space=vmem, size = 0x400, scoped, tag = 'input window, operand 2, single buffered']
    #allocation7 [shape = 'u8[1048576]{0}', space=vmem, size = 0x100000, scoped, tag = 'input window, operand 3, single buffered']
    #allocation8 [shape = 's32[1]{0}', space=sflag, size = 0x4, scoped, tag = 'scoped memory for prompt_learner_forward.1']
    #allocation9 [shape = 'u8[8192]{0}', space=vmem, size = 0x2000, scoped, tag = 'input window, operand 4, single buffered']
    #allocation10 [shape = 'u8[16384]{0}', space=vmem, size = 0x4000, scoped, tag = 'input window, operand 5, single buffered']
    #allocation11 [shape = 's32[1]{0}', space=sflag, size = 0x4, scoped, tag = 'scoped memory for prompt_learner_forward.1']
    #allocation12 [shape = 'u8[8192]{0}', space=vmem, size = 0x2000, scoped, tag = 'input window, operand 6, single buffered']
    #allocation13 [shape = 'u8[1179648]{0}', space=vmem, size = 0x120000, scoped, tag = 'input window, operand 7, single buffered']
    #allocation14 [shape = 's32[1]{0}', space=sflag, size = 0x4, scoped, tag = 'scoped memory for prompt_learner_forward.1']
    %15 = vsyncpa [#allocation3], 0
    %16 = vsyncpa [#allocation5], 0
    %17 = vsyncpa [#allocation8], 0
    %18 = vsyncpa [#allocation11], 0
    %19 = vsyncpa [#allocation14], 0
    // Predicated region
    $region2: #{prompt_learner_forward.1} parent=1 // pred_check
      _
    $region3: #{prompt_learner_forward.1} parent=1 // pred_check_branch
      %21 = sbr.rel (0) target = $region5
    $region4: #{prompt_learner_forward.1} parent=1 // pred_region
      %s23 = ssub.s32 512, 512
      %24 = vsyncadd [#allocation3], %s23
      %s26 = sshll.u32 [#allocation2], 4
      %s27 = int_to_ptr.vmem [resolvable:$true] %s26
      %29 = dma.hbm_to_vmem [thread:$0]  %s0, 512, %s27, [#allocation3]
    $region5: #{prompt_learner_forward.1} parent=1 // pred_fallthru
      _
    // Predicated region
    $region6: #{prompt_learner_forward.1} parent=1 // pred_check
      _
    $region7: #{prompt_learner_forward.1} parent=1 // pred_check_branch
      %31 = sbr.rel (0) target = $region9
    $region8: #{prompt_learner_forward.1} parent=1 // pred_region
      %s33 = ssub.s32 8192, 8192
      %34 = vsyncadd [#allocation5], %s33
      %s35 = sshll.u32 [#allocation4], 4
      %s36 = int_to_ptr.vmem [resolvable:$true] %s35
      %41 = dma.hbm_to_vmem [thread:$0]  %s1, 8192, %s36, [#allocation5], 128, 128, 8
    $region9: #{prompt_learner_forward.1} parent=1 // pred_fallthru
      _
    // Predicated region
    $region10: #{prompt_learner_forward.1} parent=1 // pred_check
      _
    $region11: #{prompt_learner_forward.1} parent=1 // pred_check_branch
      %43 = sbr.rel (0) target = $region13
    $region12: #{prompt_learner_forward.1} parent=1 // pred_region
      %s45 = ssub.s32 16, 16
      %46 = vsyncadd [#allocation5], %s45
      %s48 = sshll.u32 [#allocation6], 4
      %s49 = int_to_ptr.vmem [resolvable:$true] %s48
      %51 = dma.hbm_to_vmem [thread:$0]  %s2, 16, %s49, [#allocation5]
    $region13: #{prompt_learner_forward.1} parent=1 // pred_fallthru
      _
    // Predicated region
    $region14: #{prompt_learner_forward.1} parent=1 // pred_check
      _
    $region15: #{prompt_learner_forward.1} parent=1 // pred_check_branch
      %53 = sbr.rel (0) target = $region17
    $region16: #{prompt_learner_forward.1} parent=1 // pred_region
      %s55 = ssub.s32 32768, 32768
      %56 = vsyncadd [#allocation8], %s55
      %s57 = sshll.u32 [#allocation7], 4
      %s58 = int_to_ptr.vmem [resolvable:$true] %s57
      %63 = dma.hbm_to_vmem [thread:$0]  %s3, 32768, %s58, [#allocation8], 2048, 2048, 128
    $region17: #{prompt_learner_forward.1} parent=1 // pred_fallthru
      _
    // Predicated region
    $region18: #{prompt_learner_forward.1} parent=1 // pred_check
      _
    $region19: #{prompt_learner_forward.1} parent=1 // pred_check_branch
      %65 = sbr.rel (0) target = $region21
    $region20: #{prompt_learner_forward.1} parent=1 // pred_region
      %s67 = ssub.s32 256, 256
      %68 = vsyncadd [#allocation8], %s67
      %s70 = sshll.u32 [#allocation9], 4
      %s71 = int_to_ptr.vmem [resolvable:$true] %s70
      %73 = dma.hbm_to_vmem [thread:$0]  %s4, 256, %s71, [#allocation8]
    $region21: #{prompt_learner_forward.1} parent=1 // pred_fallthru
      _
    // Predicated region
    $region22: #{prompt_learner_forward.1} parent=1 // pred_check
      _
    $region23: #{prompt_learner_forward.1} parent=1 // pred_check_branch
      %75 = sbr.rel (0) target = $region25
    $region24: #{prompt_learner_forward.1} parent=1 // pred_region
      %s77 = ssub.s32 512, 512
      %78 = vsyncadd [#allocation11], %s77
      %s79 = sshll.u32 [#allocation10], 4
      %s80 = int_to_ptr.vmem [resolvable:$true] %s79
      %85 = dma.hbm_to_vmem [thread:$0]  %s5, 512, %s80, [#allocation11], 64, 64, 4
    $region25: #{prompt_learner_forward.1} parent=1 // pred_fallthru
      _
    // Predicated region
    $region26: #{prompt_learner_forward.1} parent=1 // pred_check
      _
    $region27: #{prompt_learner_forward.1} parent=1 // pred_check_branch
      %87 = sbr.rel (0) target = $region29
    $region28: #{prompt_learner_forward.1} parent=1 // pred_region
      %s89 = ssub.s32 256, 256
      %90 = vsyncadd [#allocation11], %s89
      %s92 = sshll.u32 [#allocation12], 4
      %s93 = int_to_ptr.vmem [resolvable:$true] %s92
      %95 = dma.hbm_to_vmem [thread:$0]  %s6, 256, %s93, [#allocation11]
    $region29: #{prompt_learner_forward.1} parent=1 // pred_fallthru
      _
    // Predicated region
    $region30: #{prompt_learner_forward.1} parent=1 // pred_check
      _
    $region31: #{prompt_learner_forward.1} parent=1 // pred_check_branch
      %97 = sbr.rel (0) target = $region33
    $region32: #{prompt_learner_forward.1} parent=1 // pred_region
      %s99 = ssub.s32 36864, 36864
      %100 = vsyncadd [#allocation14], %s99
      %s101 = sshll.u32 [#allocation13], 4
      %s102 = int_to_ptr.vmem [resolvable:$true] %s101
      %107 = dma.hbm_to_vmem [thread:$0]  %s7, 36864, %s102, [#allocation14], 512, 512, 32
    $region33: #{prompt_learner_forward.1} parent=1 // pred_fallthru
      _
    // Predicated region
    $region34: #{prompt_learner_forward.1} parent=1 // pred_check
      _
    $region35: #{prompt_learner_forward.1} parent=1 // pred_check_branch
      %109 = sbr.rel (0) target = $region37
    $region36: #{prompt_learner_forward.1} parent=1 // pred_region
      %110 = dma.done [#allocation3], 512
    $region37: #{prompt_learner_forward.1} parent=1 // pred_fallthru
      _
    // Predicated region
    $region38: #{prompt_learner_forward.1} parent=1 // pred_check
      _
    $region39: #{prompt_learner_forward.1} parent=1 // pred_check_branch
      %112 = sbr.rel (0) target = $region41
    $region40: #{prompt_learner_forward.1} parent=1 // pred_region
      %113 = dma.done [#allocation5], 8192
    $region41: #{prompt_learner_forward.1} parent=1 // pred_fallthru
      _
    // Predicated region
    $region42: #{prompt_learner_forward.1} parent=1 // pred_check
      _
    $region43: #{prompt_learner_forward.1} parent=1 // pred_check_branch
      %115 = sbr.rel (0) target = $region45
    $region44: #{prompt_learner_forward.1} parent=1 // pred_region
      %116 = dma.done [#allocation5], 16
    $region45: #{prompt_learner_forward.1} parent=1 // pred_fallthru
      _
    // Predicated region
    $region46: #{prompt_learner_forward.1} parent=1 // pred_check
      _
    $region47: #{prompt_learner_forward.1} parent=1 // pred_check_branch
      %118 = sbr.rel (0) target = $region49
    $region48: #{prompt_learner_forward.1} parent=1 // pred_region
      %119 = dma.done [#allocation8], 32768
    $region49: #{prompt_learner_forward.1} parent=1 // pred_fallthru
      _
    // Predicated region
    $region50: #{prompt_learner_forward.1} parent=1 // pred_check
      _
    $region51: #{prompt_learner_forward.1} parent=1 // pred_check_branch
      %121 = sbr.rel (0) target = $region53
    $region52: #{prompt_learner_forward.1} parent=1 // pred_region
      %122 = dma.done [#allocation8], 256
    $region53: #{prompt_learner_forward.1} parent=1 // pred_fallthru
      _
    // Predicated region
    $region54: #{prompt_learner_forward.1} parent=1 // pred_check
      _
    $region55: #{prompt_learner_forward.1} parent=1 // pred_check_branch
      %124 = sbr.rel (0) target = $region57
    $region56: #{prompt_learner_forward.1} parent=1 // pred_region
      %125 = dma.done [#allocation11], 512
    $region57: #{prompt_learner_forward.1} parent=1 // pred_fallthru
      _
    // Predicated region
    $region58: #{prompt_learner_forward.1} parent=1 // pred_check
      _
    $region59: #{prompt_learner_forward.1} parent=1 // pred_check_branch
      %127 = sbr.rel (0) target = $region61
    $region60: #{prompt_learner_forward.1} parent=1 // pred_region
      %128 = dma.done [#allocation11], 256
    $region61: #{prompt_learner_forward.1} parent=1 // pred_fallthru
      _
    // Predicated region
    $region62: #{prompt_learner_forward.1} parent=1 // pred_check
      _
    $region63: #{prompt_learner_forward.1} parent=1 // pred_check_branch
      %130 = sbr.rel (0) target = $region65
    $region64: #{prompt_learner_forward.1} parent=1 // pred_region
      %131 = dma.done [#allocation14], 36864
    $region65: #{prompt_learner_forward.1} parent=1 // pred_fallthru
      _
    %v132 = vld [vmem:[#allocation2] sm:$0xff]
    %v133 = vld [vmem:[#allocation2 + $0x8] sm:$0xff]
    %v134 = vld [vmem:[#allocation2 + $0x10] sm:$0xff]
    %v135 = vld [vmem:[#allocation2 + $0x18] sm:$0xff]
    %v136 = vld [vmem:[#allocation4] sm:$0xff]
    %v137 = vld [vmem:[#allocation4 + $0x8] sm:$0xff]
    %v138 = vld [vmem:[#allocation4 + $0x10] sm:$0xff]
    %v139 = vld [vmem:[#allocation4 + $0x18] sm:$0xff]
    %v140 = vld [vmem:[#allocation4 + $0x20] sm:$0xff]
    %v141 = vld [vmem:[#allocation4 + $0x28] sm:$0xff]
    %v142 = vld [vmem:[#allocation4 + $0x30] sm:$0xff]
    %v143 = vld [vmem:[#allocation4 + $0x38] sm:$0xff]
    %v144 = vld [vmem:[#allocation4 + $0x40] sm:$0xff]
    %v145 = vld [vmem:[#allocation4 + $0x48] sm:$0xff]
    %v146 = vld [vmem:[#allocation4 + $0x50] sm:$0xff]
    %v147 = vld [vmem:[#allocation4 + $0x58] sm:$0xff]
    %v148 = vld [vmem:[#allocation4 + $0x60] sm:$0xff]
    %v149 = vld [vmem:[#allocation4 + $0x68] sm:$0xff]
    %v150 = vld [vmem:[#allocation4 + $0x70] sm:$0xff]
    %v151 = vld [vmem:[#allocation4 + $0x78] sm:$0xff]
    %v152 = vld [vmem:[#allocation4 + $0x80] sm:$0xff]
    %v153 = vld [vmem:[#allocation4 + $0x88] sm:$0xff]
    %v154 = vld [vmem:[#allocation4 + $0x90] sm:$0xff]
    %v155 = vld [vmem:[#allocation4 + $0x98] sm:$0xff]
    %v156 = vld [vmem:[#allocation4 + $0xa0] sm:$0xff]
    %v157 = vld [vmem:[#allocation4 + $0xa8] sm:$0xff]
    %v158 = vld [vmem:[#allocation4 + $0xb0] sm:$0xff]
    %v159 = vld [vmem:[#allocation4 + $0xb8] sm:$0xff]
    %v160 = vld [vmem:[#allocation4 + $0xc0] sm:$0xff]
    %v161 = vld [vmem:[#allocation4 + $0xc8] sm:$0xff]
    %v162 = vld [vmem:[#allocation4 + $0xd0] sm:$0xff]
    %v163 = vld [vmem:[#allocation4 + $0xd8] sm:$0xff]
    %v164 = vld [vmem:[#allocation4 + $0xe0] sm:$0xff]
    %v165 = vld [vmem:[#allocation4 + $0xe8] sm:$0xff]
    %v166 = vld [vmem:[#allocation4 + $0xf0] sm:$0xff]
    %v167 = vld [vmem:[#allocation4 + $0xf8] sm:$0xff]
    %v168 = vld [vmem:[#allocation4 + $0x100] sm:$0xff]
    %v169 = vld [vmem:[#allocation4 + $0x108] sm:$0xff]
    %v170 = vld [vmem:[#allocation4 + $0x110] sm:$0xff]
    %v171 = vld [vmem:[#allocation4 + $0x118] sm:$0xff]
    %v172 = vld [vmem:[#allocation4 + $0x120] sm:$0xff]
    %v173 = vld [vmem:[#allocation4 + $0x128] sm:$0xff]
    %v174 = vld [vmem:[#allocation4 + $0x130] sm:$0xff]
    %v175 = vld [vmem:[#allocation4 + $0x138] sm:$0xff]
    %v176 = vld [vmem:[#allocation4 + $0x140] sm:$0xff]
    %v177 = vld [vmem:[#allocation4 + $0x148] sm:$0xff]
    %v178 = vld [vmem:[#allocation4 + $0x150] sm:$0xff]
    %v179 = vld [vmem:[#allocation4 + $0x158] sm:$0xff]
    %v180 = vld [vmem:[#allocation4 + $0x160] sm:$0xff]
    %v181 = vld [vmem:[#allocation4 + $0x168] sm:$0xff]
    %v182 = vld [vmem:[#allocation4 + $0x170] sm:$0xff]
    %v183 = vld [vmem:[#allocation4 + $0x178] sm:$0xff]
    %v184 = vld [vmem:[#allocation4 + $0x180] sm:$0xff]
    %v185 = vld [vmem:[#allocation4 + $0x188] sm:$0xff]
    %v186 = vld [vmem:[#allocation4 + $0x190] sm:$0xff]
    %v187 = vld [vmem:[#allocation4 + $0x198] sm:$0xff]
    %v188 = vld [vmem:[#allocation4 + $0x1a0] sm:$0xff]
    %v189 = vld [vmem:[#allocation4 + $0x1a8] sm:$0xff]
    %v190 = vld [vmem:[#allocation4 + $0x1b0] sm:$0xff]
    %v191 = vld [vmem:[#allocation4 + $0x1b8] sm:$0xff]
    %v192 = vld [vmem:[#allocation4 + $0x1c0] sm:$0xff]
    %v193 = vld [vmem:[#allocation4 + $0x1c8] sm:$0xff]
    %v194 = vld [vmem:[#allocation4 + $0x1d0] sm:$0xff]
    %v195 = vld [vmem:[#allocation4 + $0x1d8] sm:$0xff]
    %v196 = vld [vmem:[#allocation4 + $0x1e0] sm:$0xff]
    %v197 = vld [vmem:[#allocation4 + $0x1e8] sm:$0xff]
    %v198 = vld [vmem:[#allocation4 + $0x1f0] sm:$0xff]
    %v199 = vld [vmem:[#allocation4 + $0x1f8] sm:$0xff]
    %v200 = vld [vmem:[#allocation6] sm:$0x1]
    %v202 = vlaneseq
    %v203 = vshrl.u32 %v202, 7
    %v204 = vsub.s32 0, %v203
    %v205 = vrot.slane %v200, %v204
    %207 = vmatprep.subr.mxu0 0.0
    %208 = vmatpush1.msra.mxu0 %v151
    %209 = vmatprep.subr.mxu0 0.0
    %210 = vmatpush1.msra.mxu0 %v150
    %211 = vmatprep.subr.mxu0 0.0
    %212 = vmatpush1.msra.mxu0 %v149
    %213 = vmatprep.subr.mxu0 0.0
    %214 = vmatpush1.msra.mxu0 %v148
    %215 = vmatprep.subr.mxu0 0.0
    %216 = vmatpush1.msra.mxu0 %v147
    %217 = vmatprep.subr.mxu0 0.0
    %218 = vmatpush1.msra.mxu0 %v146
    %219 = vmatprep.subr.mxu0 0.0
    %220 = vmatpush1.msra.mxu0 %v145
    %221 = vmatprep.subr.mxu0 0.0
    %222 = vmatpush1.msra.mxu0 %v144
    %223 = vmatprep.subr.mxu0 0.0
    %224 = vmatpush1.msra.mxu0 %v143
    %225 = vmatprep.subr.mxu0 0.0
    %226 = vmatpush1.msra.mxu0 %v142
    %227 = vmatprep.subr.mxu0 0.0
    %228 = vmatpush1.msra.mxu0 %v141
    %229 = vmatprep.subr.mxu0 0.0
    %230 = vmatpush1.msra.mxu0 %v140
    %231 = vmatprep.subr.mxu0 0.0
    %232 = vmatpush1.msra.mxu0 %v139
    %233 = vmatprep.subr.mxu0 0.0
    %234 = vmatpush1.msra.mxu0 %v138
    %235 = vmatprep.subr.mxu0 0.0
    %236 = vmatpush1.msra.mxu0 %v137
    %237 = vmatprep.subr.mxu0 0.0
    %238 = vmatpush1.msra.mxu0 %v136
    %239 = vmatprep.subr.mxu0 0.0
    %240 = vmatpush2.msra.mxu0 %v167
    %241 = vmatprep.subr.mxu0 0.0
    %242 = vmatpush2.msra.mxu0 %v166
    %243 = vmatprep.subr.mxu0 0.0
    %244 = vmatpush2.msra.mxu0 %v165
    %245 = vmatprep.subr.mxu0 0.0
    %246 = vmatpush2.msra.mxu0 %v164
    %247 = vmatprep.subr.mxu0 0.0
    %248 = vmatpush2.msra.mxu0 %v163
    %249 = vmatprep.subr.mxu0 0.0
    %250 = vmatpush2.msra.mxu0 %v162
    %251 = vmatprep.subr.mxu0 0.0
    %252 = vmatpush2.msra.mxu0 %v161
    %253 = vmatprep.subr.mxu0 0.0
    %254 = vmatpush2.msra.mxu0 %v160
    %255 = vmatprep.subr.mxu0 0.0
    %256 = vmatpush2.msra.mxu0 %v159
    %257 = vmatprep.subr.mxu0 0.0
    %258 = vmatpush2.msra.mxu0 %v158
    %259 = vmatprep.subr.mxu0 0.0
    %260 = vmatpush2.msra.mxu0 %v157
    %261 = vmatprep.subr.mxu0 0.0
    %262 = vmatpush2.msra.mxu0 %v156
    %263 = vmatprep.subr.mxu0 0.0
    %264 = vmatpush2.msra.mxu0 %v155
    %265 = vmatprep.subr.mxu0 0.0
    %266 = vmatpush2.msra.mxu0 %v154
    %267 = vmatprep.subr.mxu0 0.0
    %268 = vmatpush2.msra.mxu0 %v153
    %269 = vmatprep.subr.mxu0 0.0
    %270 = vmatpush2.msra.mxu0 %v152
    %271 = vmatprep.mubr.f32.mxu0 %v133
    %272 = vmatmul.mubr.f32.gmra.mxu0 %v132
    %v273 = vpop.f32.mrf.mxu0
    %v274 = vadd.f32 %v205, %v273
    %v275 = vpop.f32.mrf.mxu0
    %276 = vdwg.mxu0
    %277 = vmatprep.subr.mxu0 0.0
    %278 = vmatpush1.msra.mxu0 %v183
    %279 = vmatprep.subr.mxu0 0.0
    %280 = vmatpush1.msra.mxu0 %v182
    %281 = vmatprep.subr.mxu0 0.0
    %282 = vmatpush1.msra.mxu0 %v181
    %283 = vmatprep.subr.mxu0 0.0
    %284 = vmatpush1.msra.mxu0 %v180
    %285 = vmatprep.subr.mxu0 0.0
    %286 = vmatpush1.msra.mxu0 %v179
    %287 = vmatprep.subr.mxu0 0.0
    %288 = vmatpush1.msra.mxu0 %v178
    %289 = vmatprep.subr.mxu0 0.0
    %290 = vmatpush1.msra.mxu0 %v177
    %291 = vmatprep.subr.mxu0 0.0
    %292 = vmatpush1.msra.mxu0 %v176
    %293 = vmatprep.subr.mxu0 0.0
    %294 = vmatpush1.msra.mxu0 %v175
    %295 = vmatprep.subr.mxu0 0.0
    %296 = vmatpush1.msra.mxu0 %v174
    %297 = vmatprep.subr.mxu0 0.0
    %298 = vmatpush1.msra.mxu0 %v173
    %299 = vmatprep.subr.mxu0 0.0
    %300 = vmatpush1.msra.mxu0 %v172
    %301 = vmatprep.subr.mxu0 0.0
    %302 = vmatpush1.msra.mxu0 %v171
    %303 = vmatprep.subr.mxu0 0.0
    %304 = vmatpush1.msra.mxu0 %v170
    %305 = vmatprep.subr.mxu0 0.0
    %306 = vmatpush1.msra.mxu0 %v169
    %307 = vmatprep.subr.mxu0 0.0
    %308 = vmatpush1.msra.mxu0 %v168
    %309 = vmatprep.subr.mxu0 0.0
    %310 = vmatpush2.msra.mxu0 %v199
    %311 = vmatprep.subr.mxu0 0.0
    %312 = vmatpush2.msra.mxu0 %v198
    %313 = vmatprep.subr.mxu0 0.0
    %314 = vmatpush2.msra.mxu0 %v197
    %315 = vmatprep.subr.mxu0 0.0
    %316 = vmatpush2.msra.mxu0 %v196
    %317 = vmatprep.subr.mxu0 0.0
    %318 = vmatpush2.msra.mxu0 %v195
    %319 = vmatprep.subr.mxu0 0.0
    %320 = vmatpush2.msra.mxu0 %v194
    %321 = vmatprep.subr.mxu0 0.0
    %322 = vmatpush2.msra.mxu0 %v193
    %323 = vmatprep.subr.mxu0 0.0
    %324 = vmatpush2.msra.mxu0 %v192
    %325 = vmatprep.subr.mxu0 0.0
    %326 = vmatpush2.msra.mxu0 %v191
    %327 = vmatprep.subr.mxu0 0.0
    %328 = vmatpush2.msra.mxu0 %v190
    %329 = vmatprep.subr.mxu0 0.0
    %330 = vmatpush2.msra.mxu0 %v189
    %331 = vmatprep.subr.mxu0 0.0
    %332 = vmatpush2.msra.mxu0 %v188
    %333 = vmatprep.subr.mxu0 0.0
    %334 = vmatpush2.msra.mxu0 %v187
    %335 = vmatprep.subr.mxu0 0.0
    %336 = vmatpush2.msra.mxu0 %v186
    %337 = vmatprep.subr.mxu0 0.0
    %338 = vmatpush2.msra.mxu0 %v185
    %339 = vmatprep.subr.mxu0 0.0
    %340 = vmatpush2.msra.mxu0 %v184
    %341 = vmatprep.mubr.f32.mxu0 %v135
    %342 = vmatmul.mubr.f32.gmra.mxu0 %v134
    %v343 = vpop.f32.mrf.mxu0
    %v344 = vadd.f32 %v274, %v343
    %v345 = vpop.f32.mrf.mxu0
    %346 = vdwg.mxu0
    %v347 = vmul.f32 %v344, 1.702
    %v348 = vxor.u32 %v347, 2147483648
    %v349 = vmul.f32 %v348, 1.442695
    %v350 = vpow.pop %v349
    %v351 = vadd.f32 %v350, 1.0
    %v352 = vrcp.pop %v351
    %v353 = vmul.f32 1.0, %v352
    %v354 = vmul.f32 %v344, %v353
    %v355 = vld [vmem:[#allocation7] sm:$0xff]
    %v356 = vld [vmem:[#allocation7 + $0x8] sm:$0xff]
    %v357 = vld [vmem:[#allocation7 + $0x10] sm:$0xff]
    %v358 = vld [vmem:[#allocation7 + $0x18] sm:$0xff]
    %v359 = vld [vmem:[#allocation7 + $0x20] sm:$0xff]
    %v360 = vld [vmem:[#allocation7 + $0x28] sm:$0xff]
    %v361 = vld [vmem:[#allocation7 + $0x30] sm:$0xff]
    %v362 = vld [vmem:[#allocation7 + $0x38] sm:$0xff]
    %v363 = vld [vmem:[#allocation7 + $0x40] sm:$0xff]
    %v364 = vld [vmem:[#allocation7 + $0x48] sm:$0xff]
    %v365 = vld [vmem:[#allocation7 + $0x50] sm:$0xff]
    %v366 = vld [vmem:[#allocation7 + $0x58] sm:$0xff]
    %v367 = vld [vmem:[#allocation7 + $0x60] sm:$0xff]
    %v368 = vld [vmem:[#allocation7 + $0x68] sm:$0xff]
    %v369 = vld [vmem:[#allocation7 + $0x70] sm:$0xff]
    %v370 = vld [vmem:[#allocation7 + $0x78] sm:$0xff]
    %v371 = vld [vmem:[#allocation7 + $0x80] sm:$0xff]
    %v372 = vld [vmem:[#allocation7 + $0x88] sm:$0xff]
    %v373 = vld [vmem:[#allocation7 + $0x90] sm:$0xff]
    %v374 = vld [vmem:[#allocation7 + $0x98] sm:$0xff]
    %v375 = vld [vmem:[#allocation7 + $0xa0] sm:$0xff]
    %v376 = vld [vmem:[#allocation7 + $0xa8] sm:$0xff]
    %v377 = vld [vmem:[#allocation7 + $0xb0] sm:$0xff]
    %v378 = vld [vmem:[#allocation7 + $0xb8] sm:$0xff]
    %v379 = vld [vmem:[#allocation7 + $0xc0] sm:$0xff]
    %v380 = vld [vmem:[#allocation7 + $0xc8] sm:$0xff]
    %v381 = vld [vmem:[#allocation7 + $0xd0] sm:$0xff]
    %v382 = vld [vmem:[#allocation7 + $0xd8] sm:$0xff]
    %v383 = vld [vmem:[#allocation7 + $0xe0] sm:$0xff]
    %v384 = vld [vmem:[#allocation7 + $0xe8] sm:$0xff]
    %v385 = vld [vmem:[#allocation7 + $0xf0] sm:$0xff]
    %v386 = vld [vmem:[#allocation7 + $0xf8] sm:$0xff]
    %v387 = vld [vmem:[#allocation7 + $0x100] sm:$0xff]
    %v388 = vld [vmem:[#allocation7 + $0x108] sm:$0xff]
    %v389 = vld [vmem:[#allocation7 + $0x110] sm:$0xff]
    %v390 = vld [vmem:[#allocation7 + $0x118] sm:$0xff]
    %v391 = vld [vmem:[#allocation7 + $0x120] sm:$0xff]
    %v392 = vld [vmem:[#allocation7 + $0x128] sm:$0xff]
    %v393 = vld [vmem:[#allocation7 + $0x130] sm:$0xff]
    %v394 = vld [vmem:[#allocation7 + $0x138] sm:$0xff]
    %v395 = vld [vmem:[#allocation7 + $0x140] sm:$0xff]
    %v396 = vld [vmem:[#allocation7 + $0x148] sm:$0xff]
    %v397 = vld [vmem:[#allocation7 + $0x150] sm:$0xff]
    %v398 = vld [vmem:[#allocation7 + $0x158] sm:$0xff]
    %v399 = vld [vmem:[#allocation7 + $0x160] sm:$0xff]
    %v400 = vld [vmem:[#allocation7 + $0x168] sm:$0xff]
    %v401 = vld [vmem:[#allocation7 + $0x170] sm:$0xff]
    %v402 = vld [vmem:[#allocation7 + $0x178] sm:$0xff]
    %v403 = vld [vmem:[#allocation7 + $0x180] sm:$0xff]
    %v404 = vld [vmem:[#allocation7 + $0x188] sm:$0xff]
    %v405 = vld [vmem:[#allocation7 + $0x190] sm:$0xff]
    %v406 = vld [vmem:[#allocation7 + $0x198] sm:$0xff]
    %v407 = vld [vmem:[#allocation7 + $0x1a0] sm:$0xff]
    %v408 = vld [vmem:[#allocation7 + $0x1a8] sm:$0xff]
    %v409 = vld [vmem:[#allocation7 + $0x1b0] sm:$0xff]
    %v410 = vld [vmem:[#allocation7 + $0x1b8] sm:$0xff]
    %v411 = vld [vmem:[#allocation7 + $0x1c0] sm:$0xff]
    %v412 = vld [vmem:[#allocation7 + $0x1c8] sm:$0xff]
    %v413 = vld [vmem:[#allocation7 + $0x1d0] sm:$0xff]
    %v414 = vld [vmem:[#allocation7 + $0x1d8] sm:$0xff]
    %v415 = vld [vmem:[#allocation7 + $0x1e0] sm:$0xff]
    %v416 = vld [vmem:[#allocation7 + $0x1e8] sm:$0xff]
    %v417 = vld [vmem:[#allocation7 + $0x1f0] sm:$0xff]
    %v418 = vld [vmem:[#allocation7 + $0x1f8] sm:$0xff]
    %v419 = vld [vmem:[#allocation7 + $0x200] sm:$0xff]
    %v420 = vld [vmem:[#allocation7 + $0x208] sm:$0xff]
    %v421 = vld [vmem:[#allocation7 + $0x210] sm:$0xff]
    %v422 = vld [vmem:[#allocation7 + $0x218] sm:$0xff]
    %v423 = vld [vmem:[#allocation7 + $0x220] sm:$0xff]
    %v424 = vld [vmem:[#allocation7 + $0x228] sm:$0xff]
    %v425 = vld [vmem:[#allocation7 + $0x230] sm:$0xff]
    %v426 = vld [vmem:[#allocation7 + $0x238] sm:$0xff]
    %v427 = vld [vmem:[#allocation7 + $0x240] sm:$0xff]
    %v428 = vld [vmem:[#allocation7 + $0x248] sm:$0xff]
    %v429 = vld [vmem:[#allocation7 + $0x250] sm:$0xff]
    %v430 = vld [vmem:[#allocation7 + $0x258] sm:$0xff]
    %v431 = vld [vmem:[#allocation7 + $0x260] sm:$0xff]
    %v432 = vld [vmem:[#allocation7 + $0x268] sm:$0xff]
    %v433 = vld [vmem:[#allocation7 + $0x270] sm:$0xff]
    %v434 = vld [vmem:[#allocation7 + $0x278] sm:$0xff]
    %v435 = vld [vmem:[#allocation7 + $0x280] sm:$0xff]
    %v436 = vld [vmem:[#allocation7 + $0x288] sm:$0xff]
    %v437 = vld [vmem:[#allocation7 + $0x290] sm:$0xff]
    %v438 = vld [vmem:[#allocation7 + $0x298] sm:$0xff]
    %v439 = vld [vmem:[#allocation7 + $0x2a0] sm:$0xff]
    %v440 = vld [vmem:[#allocation7 + $0x2a8] sm:$0xff]
    %v441 = vld [vmem:[#allocation7 + $0x2b0] sm:$0xff]
    %v442 = vld [vmem:[#allocation7 + $0x2b8] sm:$0xff]
    %v443 = vld [vmem:[#allocation7 + $0x2c0] sm:$0xff]
    %v444 = vld [vmem:[#allocation7 + $0x2c8] sm:$0xff]
    %v445 = vld [vmem:[#allocation7 + $0x2d0] sm:$0xff]
    %v446 = vld [vmem:[#allocation7 + $0x2d8] sm:$0xff]
    %v447 = vld [vmem:[#allocation7 + $0x2e0] sm:$0xff]
    %v448 = vld [vmem:[#allocation7 + $0x2e8] sm:$0xff]
    %v449 = vld [vmem:[#allocation7 + $0x2f0] sm:$0xff]
    %v450 = vld [vmem:[#allocation7 + $0x2f8] sm:$0xff]
    %v451 = vld [vmem:[#allocation7 + $0x300] sm:$0xff]
    %v452 = vld [vmem:[#allocation7 + $0x308] sm:$0xff]
    %v453 = vld [vmem:[#allocation7 + $0x310] sm:$0xff]
    %v454 = vld [vmem:[#allocation7 + $0x318] sm:$0xff]
    %v455 = vld [vmem:[#allocation7 + $0x320] sm:$0xff]
    %v456 = vld [vmem:[#allocation7 + $0x328] sm:$0xff]
    %v457 = vld [vmem:[#allocation7 + $0x330] sm:$0xff]
    %v458 = vld [vmem:[#allocation7 + $0x338] sm:$0xff]
    %v459 = vld [vmem:[#allocation7 + $0x340] sm:$0xff]
    %v460 = vld [vmem:[#allocation7 + $0x348] sm:$0xff]
    %v461 = vld [vmem:[#allocation7 + $0x350] sm:$0xff]
    %v462 = vld [vmem:[#allocation7 + $0x358] sm:$0xff]
    %v463 = vld [vmem:[#allocation7 + $0x360] sm:$0xff]
    %v464 = vld [vmem:[#allocation7 + $0x368] sm:$0xff]
    %v465 = vld [vmem:[#allocation7 + $0x370] sm:$0xff]
    %v466 = vld [vmem:[#allocation7 + $0x378] sm:$0xff]
    %v467 = vld [vmem:[#allocation7 + $0x380] sm:$0xff]
    %v468 = vld [vmem:[#allocation7 + $0x388] sm:$0xff]
    %v469 = vld [vmem:[#allocation7 + $0x390] sm:$0xff]
    %v470 = vld [vmem:[#allocation7 + $0x398] sm:$0xff]
    %v471 = vld [vmem:[#allocation7 + $0x3a0] sm:$0xff]
    %v472 = vld [vmem:[#allocation7 + $0x3a8] sm:$0xff]
    %v473 = vld [vmem:[#allocation7 + $0x3b0] sm:$0xff]
    %v474 = vld [vmem:[#allocation7 + $0x3b8] sm:$0xff]
    %v475 = vld [vmem:[#allocation7 + $0x3c0] sm:$0xff]
    %v476 = vld [vmem:[#allocation7 + $0x3c8] sm:$0xff]
    %v477 = vld [vmem:[#allocation7 + $0x3d0] sm:$0xff]
    %v478 = vld [vmem:[#allocation7 + $0x3d8] sm:$0xff]
    %v479 = vld [vmem:[#allocation7 + $0x3e0] sm:$0xff]
    %v480 = vld [vmem:[#allocation7 + $0x3e8] sm:$0xff]
    %v481 = vld [vmem:[#allocation7 + $0x3f0] sm:$0xff]
    %v482 = vld [vmem:[#allocation7 + $0x3f8] sm:$0xff]
    %v483 = vld [vmem:[#allocation7 + $0x400] sm:$0xff]
    %v484 = vld [vmem:[#allocation7 + $0x408] sm:$0xff]
    %v485 = vld [vmem:[#allocation7 + $0x410] sm:$0xff]
    %v486 = vld [vmem:[#allocation7 + $0x418] sm:$0xff]
    %v487 = vld [vmem:[#allocation7 + $0x420] sm:$0xff]
    %v488 = vld [vmem:[#allocation7 + $0x428] sm:$0xff]
    %v489 = vld [vmem:[#allocation7 + $0x430] sm:$0xff]
    %v490 = vld [vmem:[#allocation7 + $0x438] sm:$0xff]
    %v491 = vld [vmem:[#allocation7 + $0x440] sm:$0xff]
    %v492 = vld [vmem:[#allocation7 + $0x448] sm:$0xff]
    %v493 = vld [vmem:[#allocation7 + $0x450] sm:$0xff]
    %v494 = vld [vmem:[#allocation7 + $0x458] sm:$0xff]
    %v495 = vld [vmem:[#allocation7 + $0x460] sm:$0xff]
    %v496 = vld [vmem:[#allocation7 + $0x468] sm:$0xff]
    %v497 = vld [vmem:[#allocation7 + $0x470] sm:$0xff]
    %v498 = vld [vmem:[#allocation7 + $0x478] sm:$0xff]
    %v499 = vld [vmem:[#allocation7 + $0x480] sm:$0xff]
    %v500 = vld [vmem:[#allocation7 + $0x488] sm:$0xff]
    %v501 = vld [vmem:[#allocation7 + $0x490] sm:$0xff]
    %v502 = vld [vmem:[#allocation7 + $0x498] sm:$0xff]
    %v503 = vld [vmem:[#allocation7 + $0x4a0] sm:$0xff]
    %v504 = vld [vmem:[#allocation7 + $0x4a8] sm:$0xff]
    %v505 = vld [vmem:[#allocation7 + $0x4b0] sm:$0xff]
    %v506 = vld [vmem:[#allocation7 + $0x4b8] sm:$0xff]
    %v507 = vld [vmem:[#allocation7 + $0x4c0] sm:$0xff]
    %v508 = vld [vmem:[#allocation7 + $0x4c8] sm:$0xff]
    %v509 = vld [vmem:[#allocation7 + $0x4d0] sm:$0xff]
    %v510 = vld [vmem:[#allocation7 + $0x4d8] sm:$0xff]
    %v511 = vld [vmem:[#allocation7 + $0x4e0] sm:$0xff]
    %v512 = vld [vmem:[#allocation7 + $0x4e8] sm:$0xff]
    %v513 = vld [vmem:[#allocation7 + $0x4f0] sm:$0xff]
    %v514 = vld [vmem:[#allocation7 + $0x4f8] sm:$0xff]
    %v515 = vld [vmem:[#allocation7 + $0x500] sm:$0xff]
    %v516 = vld [vmem:[#allocation7 + $0x508] sm:$0xff]
    %v517 = vld [vmem:[#allocation7 + $0x510] sm:$0xff]
    %v518 = vld [vmem:[#allocation7 + $0x518] sm:$0xff]
    %v519 = vld [vmem:[#allocation7 + $0x520] sm:$0xff]
    %v520 = vld [vmem:[#allocation7 + $0x528] sm:$0xff]
    %v521 = vld [vmem:[#allocation7 + $0x530] sm:$0xff]
    %v522 = vld [vmem:[#allocation7 + $0x538] sm:$0xff]
    %v523 = vld [vmem:[#allocation7 + $0x540] sm:$0xff]
    %v524 = vld [vmem:[#allocation7 + $0x548] sm:$0xff]
    %v525 = vld [vmem:[#allocation7 + $0x550] sm:$0xff]
    %v526 = vld [vmem:[#allocation7 + $0x558] sm:$0xff]
    %v527 = vld [vmem:[#allocation7 + $0x560] sm:$0xff]
    %v528 = vld [vmem:[#allocation7 + $0x568] sm:$0xff]
    %v529 = vld [vmem:[#allocation7 + $0x570] sm:$0xff]
    %v530 = vld [vmem:[#allocation7 + $0x578] sm:$0xff]
    %v531 = vld [vmem:[#allocation7 + $0x580] sm:$0xff]
    %v532 = vld [vmem:[#allocation7 + $0x588] sm:$0xff]
    %v533 = vld [vmem:[#allocation7 + $0x590] sm:$0xff]
    %v534 = vld [vmem:[#allocation7 + $0x598] sm:$0xff]
    %v535 = vld [vmem:[#allocation7 + $0x5a0] sm:$0xff]
    %v536 = vld [vmem:[#allocation7 + $0x5a8] sm:$0xff]
    %v537 = vld [vmem:[#allocation7 + $0x5b0] sm:$0xff]
    %v538 = vld [vmem:[#allocation7 + $0x5b8] sm:$0xff]
    %v539 = vld [vmem:[#allocation7 + $0x5c0] sm:$0xff]
    %v540 = vld [vmem:[#allocation7 + $0x5c8] sm:$0xff]
    %v541 = vld [vmem:[#allocation7 + $0x5d0] sm:$0xff]
    %v542 = vld [vmem:[#allocation7 + $0x5d8] sm:$0xff]
    %v543 = vld [vmem:[#allocation7 + $0x5e0] sm:$0xff]
    %v544 = vld [vmem:[#allocation7 + $0x5e8] sm:$0xff]
    %v545 = vld [vmem:[#allocation7 + $0x5f0] sm:$0xff]
    %v546 = vld [vmem:[#allocation7 + $0x5f8] sm:$0xff]
    %v547 = vld [vmem:[#allocation7 + $0x600] sm:$0xff]
    %v548 = vld [vmem:[#allocation7 + $0x608] sm:$0xff]
    %v549 = vld [vmem:[#allocation7 + $0x610] sm:$0xff]
    %v550 = vld [vmem:[#allocation7 + $0x618] sm:$0xff]
    %v551 = vld [vmem:[#allocation7 + $0x620] sm:$0xff]
    %v552 = vld [vmem:[#allocation7 + $0x628] sm:$0xff]
    %v553 = vld [vmem:[#allocation7 + $0x630] sm:$0xff]
    %v554 = vld [vmem:[#allocation7 + $0x638] sm:$0xff]
    %v555 = vld [vmem:[#allocation7 + $0x640] sm:$0xff]
    %v556 = vld [vmem:[#allocation7 + $0x648] sm:$0xff]
    %v557 = vld [vmem:[#allocation7 + $0x650] sm:$0xff]
    %v558 = vld [vmem:[#allocation7 + $0x658] sm:$0xff]
    %v559 = vld [vmem:[#allocation7 + $0x660] sm:$0xff]
    %v560 = vld [vmem:[#allocation7 + $0x668] sm:$0xff]
    %v561 = vld [vmem:[#allocation7 + $0x670] sm:$0xff]
    %v562 = vld [vmem:[#allocation7 + $0x678] sm:$0xff]
    %v563 = vld [vmem:[#allocation7 + $0x680] sm:$0xff]
    %v564 = vld [vmem:[#allocation7 + $0x688] sm:$0xff]
    %v565 = vld [vmem:[#allocation7 + $0x690] sm:$0xff]
    %v566 = vld [vmem:[#allocation7 + $0x698] sm:$0xff]
    %v567 = vld [vmem:[#allocation7 + $0x6a0] sm:$0xff]
    %v568 = vld [vmem:[#allocation7 + $0x6a8] sm:$0xff]
    %v569 = vld [vmem:[#allocation7 + $0x6b0] sm:$0xff]
    %v570 = vld [vmem:[#allocation7 + $0x6b8] sm:$0xff]
    %v571 = vld [vmem:[#allocation7 + $0x6c0] sm:$0xff]
    %v572 = vld [vmem:[#allocation7 + $0x6c8] sm:$0xff]
    %v573 = vld [vmem:[#allocation7 + $0x6d0] sm:$0xff]
    %v574 = vld [vmem:[#allocation7 + $0x6d8] sm:$0xff]
    %v575 = vld [vmem:[#allocation7 + $0x6e0] sm:$0xff]
    %v576 = vld [vmem:[#allocation7 + $0x6e8] sm:$0xff]
    %v577 = vld [vmem:[#allocation7 + $0x6f0] sm:$0xff]
    %v578 = vld [vmem:[#allocation7 + $0x6f8] sm:$0xff]
    %v579 = vld [vmem:[#allocation7 + $0x700] sm:$0xff]
    %v580 = vld [vmem:[#allocation7 + $0x708] sm:$0xff]
    %v581 = vld [vmem:[#allocation7 + $0x710] sm:$0xff]
    %v582 = vld [vmem:[#allocation7 + $0x718] sm:$0xff]
    %v583 = vld [vmem:[#allocation7 + $0x720] sm:$0xff]
    %v584 = vld [vmem:[#allocation7 + $0x728] sm:$0xff]
    %v585 = vld [vmem:[#allocation7 + $0x730] sm:$0xff]
    %v586 = vld [vmem:[#allocation7 + $0x738] sm:$0xff]
    %v587 = vld [vmem:[#allocation7 + $0x740] sm:$0xff]
    %v588 = vld [vmem:[#allocation7 + $0x748] sm:$0xff]
    %v589 = vld [vmem:[#allocation7 + $0x750] sm:$0xff]
    %v590 = vld [vmem:[#allocation7 + $0x758] sm:$0xff]
    %v591 = vld [vmem:[#allocation7 + $0x760] sm:$0xff]
    %v592 = vld [vmem:[#allocation7 + $0x768] sm:$0xff]
    %v593 = vld [vmem:[#allocation7 + $0x770] sm:$0xff]
    %v594 = vld [vmem:[#allocation7 + $0x778] sm:$0xff]
    %v595 = vld [vmem:[#allocation7 + $0x780] sm:$0xff]
    %v596 = vld [vmem:[#allocation7 + $0x788] sm:$0xff]
    %v597 = vld [vmem:[#allocation7 + $0x790] sm:$0xff]
    %v598 = vld [vmem:[#allocation7 + $0x798] sm:$0xff]
    %v599 = vld [vmem:[#allocation7 + $0x7a0] sm:$0xff]
    %v600 = vld [vmem:[#allocation7 + $0x7a8] sm:$0xff]
    %v601 = vld [vmem:[#allocation7 + $0x7b0] sm:$0xff]
    %v602 = vld [vmem:[#allocation7 + $0x7b8] sm:$0xff]
    %v603 = vld [vmem:[#allocation7 + $0x7c0] sm:$0xff]
    %v604 = vld [vmem:[#allocation7 + $0x7c8] sm:$0xff]
    %v605 = vld [vmem:[#allocation7 + $0x7d0] sm:$0xff]
    %v606 = vld [vmem:[#allocation7 + $0x7d8] sm:$0xff]
    %v607 = vld [vmem:[#allocation7 + $0x7e0] sm:$0xff]
    %v608 = vld [vmem:[#allocation7 + $0x7e8] sm:$0xff]
    %v609 = vld [vmem:[#allocation7 + $0x7f0] sm:$0xff]
    %v610 = vld [vmem:[#allocation7 + $0x7f8] sm:$0xff]
    %v611 = vld [vmem:[#allocation9] sm:$0xff]
    %v612 = vld [vmem:[#allocation9 + $0x8] sm:$0xff]
    %v615 = vlaneseq
    %v616 = vshrl.u32 %v615, 7
    %v617 = vsub.s32 0, %v616
    %v618 = vrot.slane %v611, %v617
    %v619 = vlaneseq
    %v620 = vshrl.u32 %v619, 7
    %v621 = vsub.s32 1, %v620
    %v622 = vrot.slane %v611, %v621
    %v623 = vlaneseq
    %v624 = vshrl.u32 %v623, 7
    %v625 = vsub.s32 2, %v624
    %v626 = vrot.slane %v611, %v625
    %v627 = vlaneseq
    %v628 = vshrl.u32 %v627, 7
    %v629 = vsub.s32 3, %v628
    %v630 = vrot.slane %v611, %v629
    %v631 = vlaneseq
    %v632 = vshrl.u32 %v631, 7
    %v633 = vsub.s32 4, %v632
    %v634 = vrot.slane %v611, %v633
    %v635 = vlaneseq
    %v636 = vshrl.u32 %v635, 7
    %v637 = vsub.s32 5, %v636
    %v638 = vrot.slane %v611, %v637
    %v639 = vlaneseq
    %v640 = vshrl.u32 %v639, 7
    %v641 = vsub.s32 6, %v640
    %v642 = vrot.slane %v611, %v641
    %v643 = vlaneseq
    %v644 = vshrl.u32 %v643, 7
    %v645 = vsub.s32 7, %v644
    %v646 = vrot.slane %v611, %v645
    %v647 = vlaneseq
    %v648 = vshrl.u32 %v647, 7
    %v649 = vsub.s32 0, %v648
    %v650 = vrot.slane %v612, %v649
    %v651 = vlaneseq
    %v652 = vshrl.u32 %v651, 7
    %v653 = vsub.s32 1, %v652
    %v654 = vrot.slane %v612, %v653
    %v655 = vlaneseq
    %v656 = vshrl.u32 %v655, 7
    %v657 = vsub.s32 2, %v656
    %v658 = vrot.slane %v612, %v657
    %v659 = vlaneseq
    %v660 = vshrl.u32 %v659, 7
    %v661 = vsub.s32 3, %v660
    %v662 = vrot.slane %v612, %v661
    %v663 = vlaneseq
    %v664 = vshrl.u32 %v663, 7
    %v665 = vsub.s32 4, %v664
    %v666 = vrot.slane %v612, %v665
    %v667 = vlaneseq
    %v668 = vshrl.u32 %v667, 7
    %v669 = vsub.s32 5, %v668
    %v670 = vrot.slane %v612, %v669
    %v671 = vlaneseq
    %v672 = vshrl.u32 %v671, 7
    %v673 = vsub.s32 6, %v672
    %v674 = vrot.slane %v612, %v673
    %v675 = vlaneseq
    %v676 = vshrl.u32 %v675, 7
    %v677 = vsub.s32 7, %v676
    %v678 = vrot.slane %v612, %v677
    %695 = vmatprep.subr.mxu0 %v596
    %696 = vmatpush1.msra.mxu0 %v595
    %697 = vmatprep.subr.mxu0 %v580
    %698 = vmatpush1.msra.mxu0 %v579
    %699 = vmatprep.subr.mxu0 %v564
    %700 = vmatpush1.msra.mxu0 %v563
    %701 = vmatprep.subr.mxu0 %v548
    %702 = vmatpush1.msra.mxu0 %v547
    %703 = vmatprep.subr.mxu0 %v532
    %704 = vmatpush1.msra.mxu0 %v531
    %705 = vmatprep.subr.mxu0 %v516
    %706 = vmatpush1.msra.mxu0 %v515
    %707 = vmatprep.subr.mxu0 %v500
    %708 = vmatpush1.msra.mxu0 %v499
    %709 = vmatprep.subr.mxu0 %v484
    %710 = vmatpush1.msra.mxu0 %v483
    %711 = vmatprep.subr.mxu0 %v468
    %712 = vmatpush1.msra.mxu0 %v467
    %713 = vmatprep.subr.mxu0 %v452
    %714 = vmatpush1.msra.mxu0 %v451
    %715 = vmatprep.subr.mxu0 %v436
    %716 = vmatpush1.msra.mxu0 %v435
    %717 = vmatprep.subr.mxu0 %v420
    %718 = vmatpush1.msra.mxu0 %v419
    %719 = vmatprep.subr.mxu0 %v404
    %720 = vmatpush1.msra.mxu0 %v403
    %721 = vmatprep.subr.mxu0 %v388
    %722 = vmatpush1.msra.mxu0 %v387
    %723 = vmatprep.subr.mxu0 %v372
    %724 = vmatpush1.msra.mxu0 %v371
    %725 = vmatprep.subr.mxu0 %v356
    %726 = vmatpush1.msra.mxu0 %v355
    %727 = vmatprep.subr.mxu0 0.0
    %728 = vmatpush2.msra.mxu0 0.0
    %729 = vmatprep.subr.mxu0 0.0
    %730 = vmatpush2.msra.mxu0 0.0
    %731 = vmatprep.subr.mxu0 0.0
    %732 = vmatpush2.msra.mxu0 0.0
    %733 = vmatprep.subr.mxu0 0.0
    %734 = vmatpush2.msra.mxu0 0.0
    %735 = vmatprep.subr.mxu0 0.0
    %736 = vmatpush2.msra.mxu0 0.0
    %737 = vmatprep.subr.mxu0 0.0
    %738 = vmatpush2.msra.mxu0 0.0
    %739 = vmatprep.subr.mxu0 0.0
    %740 = vmatpush2.msra.mxu0 0.0
    %741 = vmatprep.subr.mxu0 0.0
    %742 = vmatpush2.msra.mxu0 0.0
    %743 = vmatprep.subr.mxu0 0.0
    %744 = vmatpush2.msra.mxu0 0.0
    %745 = vmatprep.subr.mxu0 0.0
    %746 = vmatpush2.msra.mxu0 0.0
    %747 = vmatprep.subr.mxu0 0.0
    %748 = vmatpush2.msra.mxu0 0.0
    %749 = vmatprep.subr.mxu0 0.0
    %750 = vmatpush2.msra.mxu0 0.0
    %751 = vmatprep.subr.mxu0 0.0
    %752 = vmatpush2.msra.mxu0 0.0
    %753 = vmatprep.subr.mxu0 0.0
    %754 = vmatpush2.msra.mxu0 0.0
    %755 = vmatprep.subr.mxu0 0.0
    %756 = vmatpush2.msra.mxu0 0.0
    %757 = vmatprep.subr.mxu0 0.0
    %758 = vmatpush2.msra.mxu0 0.0
    %759 = vmatprep.mubr.f32.mxu0 0.0
    %760 = vmatmul.mubr.f32.gmra.mxu0 %v354
    %v761 = vpop.f32.mrf.mxu0
    %v762 = vadd.f32 %v618, %v761
    %v763 = vpop.f32.mrf.mxu0
    %v764 = vadd.f32 %v622, %v763
    %765 = vdwg.mxu0
    %766 = vmatprep.subr.mxu0 %v598
    %767 = vmatpush1.msra.mxu0 %v597
    %768 = vmatprep.subr.mxu0 %v582
    %769 = vmatpush1.msra.mxu0 %v581
    %770 = vmatprep.subr.mxu0 %v566
    %771 = vmatpush1.msra.mxu0 %v565
    %772 = vmatprep.subr.mxu0 %v550
    %773 = vmatpush1.msra.mxu0 %v549
    %774 = vmatprep.subr.mxu0 %v534
    %775 = vmatpush1.msra.mxu0 %v533
    %776 = vmatprep.subr.mxu0 %v518
    %777 = vmatpush1.msra.mxu0 %v517
    %778 = vmatprep.subr.mxu0 %v502
    %779 = vmatpush1.msra.mxu0 %v501
    %780 = vmatprep.subr.mxu0 %v486
    %781 = vmatpush1.msra.mxu0 %v485
    %782 = vmatprep.subr.mxu0 %v470
    %783 = vmatpush1.msra.mxu0 %v469
    %784 = vmatprep.subr.mxu0 %v454
    %785 = vmatpush1.msra.mxu0 %v453
    %786 = vmatprep.subr.mxu0 %v438
    %787 = vmatpush1.msra.mxu0 %v437
    %788 = vmatprep.subr.mxu0 %v422
    %789 = vmatpush1.msra.mxu0 %v421
    %790 = vmatprep.subr.mxu0 %v406
    %791 = vmatpush1.msra.mxu0 %v405
    %792 = vmatprep.subr.mxu0 %v390
    %793 = vmatpush1.msra.mxu0 %v389
    %794 = vmatprep.subr.mxu0 %v374
    %795 = vmatpush1.msra.mxu0 %v373
    %796 = vmatprep.subr.mxu0 %v358
    %797 = vmatpush1.msra.mxu0 %v357
    %798 = vmatprep.subr.mxu0 0.0
    %799 = vmatpush2.msra.mxu0 0.0
    %800 = vmatprep.subr.mxu0 0.0
    %801 = vmatpush2.msra.mxu0 0.0
    %802 = vmatprep.subr.mxu0 0.0
    %803 = vmatpush2.msra.mxu0 0.0
    %804 = vmatprep.subr.mxu0 0.0
    %805 = vmatpush2.msra.mxu0 0.0
    %806 = vmatprep.subr.mxu0 0.0
    %807 = vmatpush2.msra.mxu0 0.0
    %808 = vmatprep.subr.mxu0 0.0
    %809 = vmatpush2.msra.mxu0 0.0
    %810 = vmatprep.subr.mxu0 0.0
    %811 = vmatpush2.msra.mxu0 0.0
    %812 = vmatprep.subr.mxu0 0.0
    %813 = vmatpush2.msra.mxu0 0.0
    %814 = vmatprep.subr.mxu0 0.0
    %815 = vmatpush2.msra.mxu0 0.0
    %816 = vmatprep.subr.mxu0 0.0
    %817 = vmatpush2.msra.mxu0 0.0
    %818 = vmatprep.subr.mxu0 0.0
    %819 = vmatpush2.msra.mxu0 0.0
    %820 = vmatprep.subr.mxu0 0.0
    %821 = vmatpush2.msra.mxu0 0.0
    %822 = vmatprep.subr.mxu0 0.0
    %823 = vmatpush2.msra.mxu0 0.0
    %824 = vmatprep.subr.mxu0 0.0
    %825 = vmatpush2.msra.mxu0 0.0
    %826 = vmatprep.subr.mxu0 0.0
    %827 = vmatpush2.msra.mxu0 0.0
    %828 = vmatprep.subr.mxu0 0.0
    %829 = vmatpush2.msra.mxu0 0.0
    %830 = vmatprep.mubr.f32.mxu0 0.0
    %831 = vmatmul.mubr.f32.gmra.mxu0 %v354
    %v832 = vpop.f32.mrf.mxu0
    %v833 = vadd.f32 %v626, %v832
    %v834 = vpop.f32.mrf.mxu0
    %v835 = vadd.f32 %v630, %v834
    %836 = vdwg.mxu0
    %837 = vmatprep.subr.mxu0 %v600
    %838 = vmatpush1.msra.mxu0 %v599
    %839 = vmatprep.subr.mxu0 %v584
    %840 = vmatpush1.msra.mxu0 %v583
    %841 = vmatprep.subr.mxu0 %v568
    %842 = vmatpush1.msra.mxu0 %v567
    %843 = vmatprep.subr.mxu0 %v552
    %844 = vmatpush1.msra.mxu0 %v551
    %845 = vmatprep.subr.mxu0 %v536
    %846 = vmatpush1.msra.mxu0 %v535
    %847 = vmatprep.subr.mxu0 %v520
    %848 = vmatpush1.msra.mxu0 %v519
    %849 = vmatprep.subr.mxu0 %v504
    %850 = vmatpush1.msra.mxu0 %v503
    %851 = vmatprep.subr.mxu0 %v488
    %852 = vmatpush1.msra.mxu0 %v487
    %853 = vmatprep.subr.mxu0 %v472
    %854 = vmatpush1.msra.mxu0 %v471
    %855 = vmatprep.subr.mxu0 %v456
    %856 = vmatpush1.msra.mxu0 %v455
    %857 = vmatprep.subr.mxu0 %v440
    %858 = vmatpush1.msra.mxu0 %v439
    %859 = vmatprep.subr.mxu0 %v424
    %860 = vmatpush1.msra.mxu0 %v423
    %861 = vmatprep.subr.mxu0 %v408
    %862 = vmatpush1.msra.mxu0 %v407
    %863 = vmatprep.subr.mxu0 %v392
    %864 = vmatpush1.msra.mxu0 %v391
    %865 = vmatprep.subr.mxu0 %v376
    %866 = vmatpush1.msra.mxu0 %v375
    %867 = vmatprep.subr.mxu0 %v360
    %868 = vmatpush1.msra.mxu0 %v359
    %869 = vmatprep.subr.mxu0 0.0
    %870 = vmatpush2.msra.mxu0 0.0
    %871 = vmatprep.subr.mxu0 0.0
    %872 = vmatpush2.msra.mxu0 0.0
    %873 = vmatprep.subr.mxu0 0.0
    %874 = vmatpush2.msra.mxu0 0.0
    %875 = vmatprep.subr.mxu0 0.0
    %876 = vmatpush2.msra.mxu0 0.0
    %877 = vmatprep.subr.mxu0 0.0
    %878 = vmatpush2.msra.mxu0 0.0
    %879 = vmatprep.subr.mxu0 0.0
    %880 = vmatpush2.msra.mxu0 0.0
    %881 = vmatprep.subr.mxu0 0.0
    %882 = vmatpush2.msra.mxu0 0.0
    %883 = vmatprep.subr.mxu0 0.0
    %884 = vmatpush2.msra.mxu0 0.0
    %885 = vmatprep.subr.mxu0 0.0
    %886 = vmatpush2.msra.mxu0 0.0
    %887 = vmatprep.subr.mxu0 0.0
    %888 = vmatpush2.msra.mxu0 0.0
    %889 = vmatprep.subr.mxu0 0.0
    %890 = vmatpush2.msra.mxu0 0.0
    %891 = vmatprep.subr.mxu0 0.0
    %892 = vmatpush2.msra.mxu0 0.0
    %893 = vmatprep.subr.mxu0 0.0
    %894 = vmatpush2.msra.mxu0 0.0
    %895 = vmatprep.subr.mxu0 0.0
    %896 = vmatpush2.msra.mxu0 0.0
    %897 = vmatprep.subr.mxu0 0.0
    %898 = vmatpush2.msra.mxu0 0.0
    %899 = vmatprep.subr.mxu0 0.0
    %900 = vmatpush2.msra.mxu0 0.0
    %901 = vmatprep.mubr.f32.mxu0 0.0
    %902 = vmatmul.mubr.f32.gmra.mxu0 %v354
    %v903 = vpop.f32.mrf.mxu0
    %v904 = vadd.f32 %v634, %v903
    %v905 = vpop.f32.mrf.mxu0
    %v906 = vadd.f32 %v638, %v905
    %907 = vdwg.mxu0
    %908 = vmatprep.subr.mxu0 %v602
    %909 = vmatpush1.msra.mxu0 %v601
    %910 = vmatprep.subr.mxu0 %v586
    %911 = vmatpush1.msra.mxu0 %v585
    %912 = vmatprep.subr.mxu0 %v570
    %913 = vmatpush1.msra.mxu0 %v569
    %914 = vmatprep.subr.mxu0 %v554
    %915 = vmatpush1.msra.mxu0 %v553
    %916 = vmatprep.subr.mxu0 %v538
    %917 = vmatpush1.msra.mxu0 %v537
    %918 = vmatprep.subr.mxu0 %v522
    %919 = vmatpush1.msra.mxu0 %v521
    %920 = vmatprep.subr.mxu0 %v506
    %921 = vmatpush1.msra.mxu0 %v505
    %922 = vmatprep.subr.mxu0 %v490
    %923 = vmatpush1.msra.mxu0 %v489
    %924 = vmatprep.subr.mxu0 %v474
    %925 = vmatpush1.msra.mxu0 %v473
    %926 = vmatprep.subr.mxu0 %v458
    %927 = vmatpush1.msra.mxu0 %v457
    %928 = vmatprep.subr.mxu0 %v442
    %929 = vmatpush1.msra.mxu0 %v441
    %930 = vmatprep.subr.mxu0 %v426
    %931 = vmatpush1.msra.mxu0 %v425
    %932 = vmatprep.subr.mxu0 %v410
    %933 = vmatpush1.msra.mxu0 %v409
    %934 = vmatprep.subr.mxu0 %v394
    %935 = vmatpush1.msra.mxu0 %v393
    %936 = vmatprep.subr.mxu0 %v378
    %937 = vmatpush1.msra.mxu0 %v377
    %938 = vmatprep.subr.mxu0 %v362
    %939 = vmatpush1.msra.mxu0 %v361
    %940 = vmatprep.subr.mxu0 0.0
    %941 = vmatpush2.msra.mxu0 0.0
    %942 = vmatprep.subr.mxu0 0.0
    %943 = vmatpush2.msra.mxu0 0.0
    %944 = vmatprep.subr.mxu0 0.0
    %945 = vmatpush2.msra.mxu0 0.0
    %946 = vmatprep.subr.mxu0 0.0
    %947 = vmatpush2.msra.mxu0 0.0
    %948 = vmatprep.subr.mxu0 0.0
    %949 = vmatpush2.msra.mxu0 0.0
    %950 = vmatprep.subr.mxu0 0.0
    %951 = vmatpush2.msra.mxu0 0.0
    %952 = vmatprep.subr.mxu0 0.0
    %953 = vmatpush2.msra.mxu0 0.0
    %954 = vmatprep.subr.mxu0 0.0
    %955 = vmatpush2.msra.mxu0 0.0
    %956 = vmatprep.subr.mxu0 0.0
    %957 = vmatpush2.msra.mxu0 0.0
    %958 = vmatprep.subr.mxu0 0.0
    %959 = vmatpush2.msra.mxu0 0.0
    %960 = vmatprep.subr.mxu0 0.0
    %961 = vmatpush2.msra.mxu0 0.0
    %962 = vmatprep.subr.mxu0 0.0
    %963 = vmatpush2.msra.mxu0 0.0
    %964 = vmatprep.subr.mxu0 0.0
    %965 = vmatpush2.msra.mxu0 0.0
    %966 = vmatprep.subr.mxu0 0.0
    %967 = vmatpush2.msra.mxu0 0.0
    %968 = vmatprep.subr.mxu0 0.0
    %969 = vmatpush2.msra.mxu0 0.0
    %970 = vmatprep.subr.mxu0 0.0
    %971 = vmatpush2.msra.mxu0 0.0
    %972 = vmatprep.mubr.f32.mxu0 0.0
    %973 = vmatmul.mubr.f32.gmra.mxu0 %v354
    %v974 = vpop.f32.mrf.mxu0
    %v975 = vadd.f32 %v642, %v974
    %v976 = vpop.f32.mrf.mxu0
    %v977 = vadd.f32 %v646, %v976
    %978 = vdwg.mxu0
    %979 = vmatprep.subr.mxu0 %v604
    %980 = vmatpush1.msra.mxu0 %v603
    %981 = vmatprep.subr.mxu0 %v588
    %982 = vmatpush1.msra.mxu0 %v587
    %983 = vmatprep.subr.mxu0 %v572
    %984 = vmatpush1.msra.mxu0 %v571
    %985 = vmatprep.subr.mxu0 %v556
    %986 = vmatpush1.msra.mxu0 %v555
    %987 = vmatprep.subr.mxu0 %v540
    %988 = vmatpush1.msra.mxu0 %v539
    %989 = vmatprep.subr.mxu0 %v524
    %990 = vmatpush1.msra.mxu0 %v523
    %991 = vmatprep.subr.mxu0 %v508
    %992 = vmatpush1.msra.mxu0 %v507
    %993 = vmatprep.subr.mxu0 %v492
    %994 = vmatpush1.msra.mxu0 %v491
    %995 = vmatprep.subr.mxu0 %v476
    %996 = vmatpush1.msra.mxu0 %v475
    %997 = vmatprep.subr.mxu0 %v460
    %998 = vmatpush1.msra.mxu0 %v459
    %999 = vmatprep.subr.mxu0 %v444
    %1000 = vmatpush1.msra.mxu0 %v443
    %1001 = vmatprep.subr.mxu0 %v428
    %1002 = vmatpush1.msra.mxu0 %v427
    %1003 = vmatprep.subr.mxu0 %v412
    %1004 = vmatpush1.msra.mxu0 %v411
    %1005 = vmatprep.subr.mxu0 %v396
    %1006 = vmatpush1.msra.mxu0 %v395
    %1007 = vmatprep.subr.mxu0 %v380
    %1008 = vmatpush1.msra.mxu0 %v379
    %1009 = vmatprep.subr.mxu0 %v364
    %1010 = vmatpush1.msra.mxu0 %v363
    %1011 = vmatprep.subr.mxu0 0.0
    %1012 = vmatpush2.msra.mxu0 0.0
    %1013 = vmatprep.subr.mxu0 0.0
    %1014 = vmatpush2.msra.mxu0 0.0
    %1015 = vmatprep.subr.mxu0 0.0
    %1016 = vmatpush2.msra.mxu0 0.0
    %1017 = vmatprep.subr.mxu0 0.0
    %1018 = vmatpush2.msra.mxu0 0.0
    %1019 = vmatprep.subr.mxu0 0.0
    %1020 = vmatpush2.msra.mxu0 0.0
    %1021 = vmatprep.subr.mxu0 0.0
    %1022 = vmatpush2.msra.mxu0 0.0
    %1023 = vmatprep.subr.mxu0 0.0
    %1024 = vmatpush2.msra.mxu0 0.0
    %1025 = vmatprep.subr.mxu0 0.0
    %1026 = vmatpush2.msra.mxu0 0.0
    %1027 = vmatprep.subr.mxu0 0.0
    %1028 = vmatpush2.msra.mxu0 0.0
    %1029 = vmatprep.subr.mxu0 0.0
    %1030 = vmatpush2.msra.mxu0 0.0
    %1031 = vmatprep.subr.mxu0 0.0
    %1032 = vmatpush2.msra.mxu0 0.0
    %1033 = vmatprep.subr.mxu0 0.0
    %1034 = vmatpush2.msra.mxu0 0.0
    %1035 = vmatprep.subr.mxu0 0.0
    %1036 = vmatpush2.msra.mxu0 0.0
    %1037 = vmatprep.subr.mxu0 0.0
    %1038 = vmatpush2.msra.mxu0 0.0
    %1039 = vmatprep.subr.mxu0 0.0
    %1040 = vmatpush2.msra.mxu0 0.0
    %1041 = vmatprep.subr.mxu0 0.0
    %1042 = vmatpush2.msra.mxu0 0.0
    %1043 = vmatprep.mubr.f32.mxu0 0.0
    %1044 = vmatmul.mubr.f32.gmra.mxu0 %v354
    %v1045 = vpop.f32.mrf.mxu0
    %v1046 = vadd.f32 %v650, %v1045
    %v1047 = vpop.f32.mrf.mxu0
    %v1048 = vadd.f32 %v654, %v1047
    %1049 = vdwg.mxu0
    %1050 = vmatprep.subr.mxu0 %v606
    %1051 = vmatpush1.msra.mxu0 %v605
    %1052 = vmatprep.subr.mxu0 %v590
    %1053 = vmatpush1.msra.mxu0 %v589
    %1054 = vmatprep.subr.mxu0 %v574
    %1055 = vmatpush1.msra.mxu0 %v573
    %1056 = vmatprep.subr.mxu0 %v558
    %1057 = vmatpush1.msra.mxu0 %v557
    %1058 = vmatprep.subr.mxu0 %v542
    %1059 = vmatpush1.msra.mxu0 %v541
    %1060 = vmatprep.subr.mxu0 %v526
    %1061 = vmatpush1.msra.mxu0 %v525
    %1062 = vmatprep.subr.mxu0 %v510
    %1063 = vmatpush1.msra.mxu0 %v509
    %1064 = vmatprep.subr.mxu0 %v494
    %1065 = vmatpush1.msra.mxu0 %v493
    %1066 = vmatprep.subr.mxu0 %v478
    %1067 = vmatpush1.msra.mxu0 %v477
    %1068 = vmatprep.subr.mxu0 %v462
    %1069 = vmatpush1.msra.mxu0 %v461
    %1070 = vmatprep.subr.mxu0 %v446
    %1071 = vmatpush1.msra.mxu0 %v445
    %1072 = vmatprep.subr.mxu0 %v430
    %1073 = vmatpush1.msra.mxu0 %v429
    %1074 = vmatprep.subr.mxu0 %v414
    %1075 = vmatpush1.msra.mxu0 %v413
    %1076 = vmatprep.subr.mxu0 %v398
    %1077 = vmatpush1.msra.mxu0 %v397
    %1078 = vmatprep.subr.mxu0 %v382
    %1079 = vmatpush1.msra.mxu0 %v381
    %1080 = vmatprep.subr.mxu0 %v366
    %1081 = vmatpush1.msra.mxu0 %v365
    %1082 = vmatprep.subr.mxu0 0.0
    %1083 = vmatpush2.msra.mxu0 0.0
    %1084 = vmatprep.subr.mxu0 0.0
    %1085 = vmatpush2.msra.mxu0 0.0
    %1086 = vmatprep.subr.mxu0 0.0
    %1087 = vmatpush2.msra.mxu0 0.0
    %1088 = vmatprep.subr.mxu0 0.0
    %1089 = vmatpush2.msra.mxu0 0.0
    %1090 = vmatprep.subr.mxu0 0.0
    %1091 = vmatpush2.msra.mxu0 0.0
    %1092 = vmatprep.subr.mxu0 0.0
    %1093 = vmatpush2.msra.mxu0 0.0
    %1094 = vmatprep.subr.mxu0 0.0
    %1095 = vmatpush2.msra.mxu0 0.0
    %1096 = vmatprep.subr.mxu0 0.0
    %1097 = vmatpush2.msra.mxu0 0.0
    %1098 = vmatprep.subr.mxu0 0.0
    %1099 = vmatpush2.msra.mxu0 0.0
    %1100 = vmatprep.subr.mxu0 0.0
    %1101 = vmatpush2.msra.mxu0 0.0
    %1102 = vmatprep.subr.mxu0 0.0
    %1103 = vmatpush2.msra.mxu0 0.0
    %1104 = vmatprep.subr.mxu0 0.0
    %1105 = vmatpush2.msra.mxu0 0.0
    %1106 = vmatprep.subr.mxu0 0.0
    %1107 = vmatpush2.msra.mxu0 0.0
    %1108 = vmatprep.subr.mxu0 0.0
    %1109 = vmatpush2.msra.mxu0 0.0
    %1110 = vmatprep.subr.mxu0 0.0
    %1111 = vmatpush2.msra.mxu0 0.0
    %1112 = vmatprep.subr.mxu0 0.0
    %1113 = vmatpush2.msra.mxu0 0.0
    %1114 = vmatprep.mubr.f32.mxu0 0.0
    %1115 = vmatmul.mubr.f32.gmra.mxu0 %v354
    %v1116 = vpop.f32.mrf.mxu0
    %v1117 = vadd.f32 %v658, %v1116
    %v1118 = vpop.f32.mrf.mxu0
    %v1119 = vadd.f32 %v662, %v1118
    %1120 = vdwg.mxu0
    %1121 = vmatprep.subr.mxu0 %v608
    %1122 = vmatpush1.msra.mxu0 %v607
    %1123 = vmatprep.subr.mxu0 %v592
    %1124 = vmatpush1.msra.mxu0 %v591
    %1125 = vmatprep.subr.mxu0 %v576
    %1126 = vmatpush1.msra.mxu0 %v575
    %1127 = vmatprep.subr.mxu0 %v560
    %1128 = vmatpush1.msra.mxu0 %v559
    %1129 = vmatprep.subr.mxu0 %v544
    %1130 = vmatpush1.msra.mxu0 %v543
    %1131 = vmatprep.subr.mxu0 %v528
    %1132 = vmatpush1.msra.mxu0 %v527
    %1133 = vmatprep.subr.mxu0 %v512
    %1134 = vmatpush1.msra.mxu0 %v511
    %1135 = vmatprep.subr.mxu0 %v496
    %1136 = vmatpush1.msra.mxu0 %v495
    %1137 = vmatprep.subr.mxu0 %v480
    %1138 = vmatpush1.msra.mxu0 %v479
    %1139 = vmatprep.subr.mxu0 %v464
    %1140 = vmatpush1.msra.mxu0 %v463
    %1141 = vmatprep.subr.mxu0 %v448
    %1142 = vmatpush1.msra.mxu0 %v447
    %1143 = vmatprep.subr.mxu0 %v432
    %1144 = vmatpush1.msra.mxu0 %v431
    %1145 = vmatprep.subr.mxu0 %v416
    %1146 = vmatpush1.msra.mxu0 %v415
    %1147 = vmatprep.subr.mxu0 %v400
    %1148 = vmatpush1.msra.mxu0 %v399
    %1149 = vmatprep.subr.mxu0 %v384
    %1150 = vmatpush1.msra.mxu0 %v383
    %1151 = vmatprep.subr.mxu0 %v368
    %1152 = vmatpush1.msra.mxu0 %v367
    %1153 = vmatprep.subr.mxu0 0.0
    %1154 = vmatpush2.msra.mxu0 0.0
    %1155 = vmatprep.subr.mxu0 0.0
    %1156 = vmatpush2.msra.mxu0 0.0
    %1157 = vmatprep.subr.mxu0 0.0
    %1158 = vmatpush2.msra.mxu0 0.0
    %1159 = vmatprep.subr.mxu0 0.0
    %1160 = vmatpush2.msra.mxu0 0.0
    %1161 = vmatprep.subr.mxu0 0.0
    %1162 = vmatpush2.msra.mxu0 0.0
    %1163 = vmatprep.subr.mxu0 0.0
    %1164 = vmatpush2.msra.mxu0 0.0
    %1165 = vmatprep.subr.mxu0 0.0
    %1166 = vmatpush2.msra.mxu0 0.0
    %1167 = vmatprep.subr.mxu0 0.0
    %1168 = vmatpush2.msra.mxu0 0.0
    %1169 = vmatprep.subr.mxu0 0.0
    %1170 = vmatpush2.msra.mxu0 0.0
    %1171 = vmatprep.subr.mxu0 0.0
    %1172 = vmatpush2.msra.mxu0 0.0
    %1173 = vmatprep.subr.mxu0 0.0
    %1174 = vmatpush2.msra.mxu0 0.0
    %1175 = vmatprep.subr.mxu0 0.0
    %1176 = vmatpush2.msra.mxu0 0.0
    %1177 = vmatprep.subr.mxu0 0.0
    %1178 = vmatpush2.msra.mxu0 0.0
    %1179 = vmatprep.subr.mxu0 0.0
    %1180 = vmatpush2.msra.mxu0 0.0
    %1181 = vmatprep.subr.mxu0 0.0
    %1182 = vmatpush2.msra.mxu0 0.0
    %1183 = vmatprep.subr.mxu0 0.0
    %1184 = vmatpush2.msra.mxu0 0.0
    %1185 = vmatprep.mubr.f32.mxu0 0.0
    %1186 = vmatmul.mubr.f32.gmra.mxu0 %v354
    %v1187 = vpop.f32.mrf.mxu0
    %v1188 = vadd.f32 %v666, %v1187
    %v1189 = vpop.f32.mrf.mxu0
    %v1190 = vadd.f32 %v670, %v1189
    %1191 = vdwg.mxu0
    %1192 = vmatprep.subr.mxu0 %v610
    %1193 = vmatpush1.msra.mxu0 %v609
    %1194 = vmatprep.subr.mxu0 %v594
    %1195 = vmatpush1.msra.mxu0 %v593
    %1196 = vmatprep.subr.mxu0 %v578
    %1197 = vmatpush1.msra.mxu0 %v577
    %1198 = vmatprep.subr.mxu0 %v562
    %1199 = vmatpush1.msra.mxu0 %v561
    %1200 = vmatprep.subr.mxu0 %v546
    %1201 = vmatpush1.msra.mxu0 %v545
    %1202 = vmatprep.subr.mxu0 %v530
    %1203 = vmatpush1.msra.mxu0 %v529
    %1204 = vmatprep.subr.mxu0 %v514
    %1205 = vmatpush1.msra.mxu0 %v513
    %1206 = vmatprep.subr.mxu0 %v498
    %1207 = vmatpush1.msra.mxu0 %v497
    %1208 = vmatprep.subr.mxu0 %v482
    %1209 = vmatpush1.msra.mxu0 %v481
    %1210 = vmatprep.subr.mxu0 %v466
    %1211 = vmatpush1.msra.mxu0 %v465
    %1212 = vmatprep.subr.mxu0 %v450
    %1213 = vmatpush1.msra.mxu0 %v449
    %1214 = vmatprep.subr.mxu0 %v434
    %1215 = vmatpush1.msra.mxu0 %v433
    %1216 = vmatprep.subr.mxu0 %v418
    %1217 = vmatpush1.msra.mxu0 %v417
    %1218 = vmatprep.subr.mxu0 %v402
    %1219 = vmatpush1.msra.mxu0 %v401
    %1220 = vmatprep.subr.mxu0 %v386
    %1221 = vmatpush1.msra.mxu0 %v385
    %1222 = vmatprep.subr.mxu0 %v370
    %1223 = vmatpush1.msra.mxu0 %v369
    %1224 = vmatprep.subr.mxu0 0.0
    %1225 = vmatpush2.msra.mxu0 0.0
    %1226 = vmatprep.subr.mxu0 0.0
    %1227 = vmatpush2.msra.mxu0 0.0
    %1228 = vmatprep.subr.mxu0 0.0
    %1229 = vmatpush2.msra.mxu0 0.0
    %1230 = vmatprep.subr.mxu0 0.0
    %1231 = vmatpush2.msra.mxu0 0.0
    %1232 = vmatprep.subr.mxu0 0.0
    %1233 = vmatpush2.msra.mxu0 0.0
    %1234 = vmatprep.subr.mxu0 0.0
    %1235 = vmatpush2.msra.mxu0 0.0
    %1236 = vmatprep.subr.mxu0 0.0
    %1237 = vmatpush2.msra.mxu0 0.0
    %1238 = vmatprep.subr.mxu0 0.0
    %1239 = vmatpush2.msra.mxu0 0.0
    %1240 = vmatprep.subr.mxu0 0.0
    %1241 = vmatpush2.msra.mxu0 0.0
    %1242 = vmatprep.subr.mxu0 0.0
    %1243 = vmatpush2.msra.mxu0 0.0
    %1244 = vmatprep.subr.mxu0 0.0
    %1245 = vmatpush2.msra.mxu0 0.0
    %1246 = vmatprep.subr.mxu0 0.0
    %1247 = vmatpush2.msra.mxu0 0.0
    %1248 = vmatprep.subr.mxu0 0.0
    %1249 = vmatpush2.msra.mxu0 0.0
    %1250 = vmatprep.subr.mxu0 0.0
    %1251 = vmatpush2.msra.mxu0 0.0
    %1252 = vmatprep.subr.mxu0 0.0
    %1253 = vmatpush2.msra.mxu0 0.0
    %1254 = vmatprep.subr.mxu0 0.0
    %1255 = vmatpush2.msra.mxu0 0.0
    %1256 = vmatprep.mubr.f32.mxu0 0.0
    %1257 = vmatmul.mubr.f32.gmra.mxu0 %v354
    %v1258 = vpop.f32.mrf.mxu0
    %v1259 = vadd.f32 %v674, %v1258
    %v1260 = vpop.f32.mrf.mxu0
    %v1261 = vadd.f32 %v678, %v1260
    %1262 = vdwg.mxu0
    %1263 = vst [vmem:[%s9] sm:$0xff] %v762
    %1264 = vst [vmem:[%s9 + $0x8] sm:$0xff] %v764
    %1265 = vst [vmem:[%s9 + $0x10] sm:$0xff] %v833
    %1266 = vst [vmem:[%s9 + $0x18] sm:$0xff] %v835
    %1267 = vst [vmem:[%s9 + $0x20] sm:$0xff] %v904
    %1268 = vst [vmem:[%s9 + $0x28] sm:$0xff] %v906
    %1269 = vst [vmem:[%s9 + $0x30] sm:$0xff] %v975
    %1270 = vst [vmem:[%s9 + $0x38] sm:$0xff] %v977
    %1271 = vst [vmem:[%s9 + $0x40] sm:$0xff] %v1046
    %1272 = vst [vmem:[%s9 + $0x48] sm:$0xff] %v1048
    %1273 = vst [vmem:[%s9 + $0x50] sm:$0xff] %v1117
    %1274 = vst [vmem:[%s9 + $0x58] sm:$0xff] %v1119
    %1275 = vst [vmem:[%s9 + $0x60] sm:$0xff] %v1188
    %1276 = vst [vmem:[%s9 + $0x68] sm:$0xff] %v1190
    %1277 = vst [vmem:[%s9 + $0x70] sm:$0xff] %v1259
    %1278 = vst [vmem:[%s9 + $0x78] sm:$0xff] %v1261
    %v1279 = vld [vmem:[#allocation10] sm:$0xf]
    %v1280 = vld [vmem:[#allocation10 + $0x4] sm:$0xf]
    %v1281 = vld [vmem:[#allocation10 + $0x8] sm:$0xf]
    %v1282 = vld [vmem:[#allocation10 + $0xc] sm:$0xf]
    %v1283 = vld [vmem:[#allocation10 + $0x10] sm:$0xf]
    %v1284 = vld [vmem:[#allocation10 + $0x14] sm:$0xf]
    %v1285 = vld [vmem:[#allocation10 + $0x18] sm:$0xf]
    %v1286 = vld [vmem:[#allocation10 + $0x1c] sm:$0xf]
    %v1287 = vlaneseq
    %vm1288 = vcmp.ge.s32.totalorder %v1287, 0
    %vm1289 = vcmp.lt.s32.totalorder %v1287, 512
    %vm1290 = vmand %vm1288, %vm1289
    %1291 = vst.msk [vmem:[%s8] ss:$8 sm:$0xf] %vm1290, %v1279
    %1292 = vst.msk [vmem:[%s8] ss:$8 sm:$0x0] %vm1290, %v1279
    %s1293 = scalar_lea.vmem %s8, 320
    %1294 = vst.msk [vmem:[%s1293] ss:$8 sm:$0xf] %vm1290, %v1280
    %1295 = vst.msk [vmem:[%s1293] ss:$8 sm:$0x0] %vm1290, %v1280
    %s1296 = scalar_lea.vmem %s8, 640
    %1297 = vst.msk [vmem:[%s1296] ss:$8 sm:$0xf] %vm1290, %v1281
    %1298 = vst.msk [vmem:[%s1296] ss:$8 sm:$0x0] %vm1290, %v1281
    %s1299 = scalar_lea.vmem %s8, 960
    %1300 = vst.msk [vmem:[%s1299] ss:$8 sm:$0xf] %vm1290, %v1282
    %1301 = vst.msk [vmem:[%s1299] ss:$8 sm:$0x0] %vm1290, %v1282
    %s1302 = scalar_lea.vmem %s8, 1280
    %1303 = vst.msk [vmem:[%s1302] ss:$8 sm:$0xf] %vm1290, %v1283
    %1304 = vst.msk [vmem:[%s1302] ss:$8 sm:$0x0] %vm1290, %v1283
    %s1305 = scalar_lea.vmem %s8, 1600
    %1306 = vst.msk [vmem:[%s1305] ss:$8 sm:$0xf] %vm1290, %v1284
    %1307 = vst.msk [vmem:[%s1305] ss:$8 sm:$0x0] %vm1290, %v1284
    %s1308 = scalar_lea.vmem %s8, 1920
    %1309 = vst.msk [vmem:[%s1308] ss:$8 sm:$0xf] %vm1290, %v1285
    %1310 = vst.msk [vmem:[%s1308] ss:$8 sm:$0x0] %vm1290, %v1285
    %s1311 = scalar_lea.vmem %s8, 2240
    %1312 = vst.msk [vmem:[%s1311] ss:$8 sm:$0xf] %vm1290, %v1286
    %1313 = vst.msk [vmem:[%s1311] ss:$8 sm:$0x0] %vm1290, %v1286
    %v1314 = vld [vmem:[#allocation12] sm:$0xff]
    %v1315 = vld [vmem:[#allocation12 + $0x8] sm:$0xff]
    %v1318 = vcombine.high %v1314, %v1314
    %v1319 = vcombine.high %v1315, %v1315
    %v1320 = vrot.slane %v1314, 7
    %v1321 = vrot.slane %v1318, 7
    %v1322 = vrot.slane %v1315, 7
    %v1323 = vrot.slane %v1319, 7
    %1328 = vst [vmem:[%s8] sm:$0x1e] %v1320
    %1329 = vst [vmem:[%s8 + $0x8] sm:$0x1e] %v1321
    %1330 = vst [vmem:[%s8 + $0x10] sm:$0x1e] %v1322
    %1331 = vst [vmem:[%s8 + $0x18] sm:$0x1e] %v1323
    %1332 = vst [vmem:[%s8 + $0x140] sm:$0x1e] %v1320
    %1333 = vst [vmem:[%s8 + $0x148] sm:$0x1e] %v1321
    %1334 = vst [vmem:[%s8 + $0x150] sm:$0x1e] %v1322
    %1335 = vst [vmem:[%s8 + $0x158] sm:$0x1e] %v1323
    %1336 = vst [vmem:[%s8 + $0x280] sm:$0x1e] %v1320
    %1337 = vst [vmem:[%s8 + $0x288] sm:$0x1e] %v1321
    %1338 = vst [vmem:[%s8 + $0x290] sm:$0x1e] %v1322
    %1339 = vst [vmem:[%s8 + $0x298] sm:$0x1e] %v1323
    %1340 = vst [vmem:[%s8 + $0x3c0] sm:$0x1e] %v1320
    %1341 = vst [vmem:[%s8 + $0x3c8] sm:$0x1e] %v1321
    %1342 = vst [vmem:[%s8 + $0x3d0] sm:$0x1e] %v1322
    %1343 = vst [vmem:[%s8 + $0x3d8] sm:$0x1e] %v1323
    %1344 = vst [vmem:[%s8 + $0x500] sm:$0x1e] %v1320
    %1345 = vst [vmem:[%s8 + $0x508] sm:$0x1e] %v1321
    %1346 = vst [vmem:[%s8 + $0x510] sm:$0x1e] %v1322
    %1347 = vst [vmem:[%s8 + $0x518] sm:$0x1e] %v1323
    %1348 = vst [vmem:[%s8 + $0x640] sm:$0x1e] %v1320
    %1349 = vst [vmem:[%s8 + $0x648] sm:$0x1e] %v1321
    %1350 = vst [vmem:[%s8 + $0x650] sm:$0x1e] %v1322
    %1351 = vst [vmem:[%s8 + $0x658] sm:$0x1e] %v1323
    %1352 = vst [vmem:[%s8 + $0x780] sm:$0x1e] %v1320
    %1353 = vst [vmem:[%s8 + $0x788] sm:$0x1e] %v1321
    %1354 = vst [vmem:[%s8 + $0x790] sm:$0x1e] %v1322
    %1355 = vst [vmem:[%s8 + $0x798] sm:$0x1e] %v1323
    %1356 = vst [vmem:[%s8 + $0x8c0] sm:$0x1e] %v1320
    %1357 = vst [vmem:[%s8 + $0x8c8] sm:$0x1e] %v1321
    %1358 = vst [vmem:[%s8 + $0x8d0] sm:$0x1e] %v1322
    %1359 = vst [vmem:[%s8 + $0x8d8] sm:$0x1e] %v1323
    %v1360 = vld [vmem:[#allocation13] sm:$0xff]
    %v1361 = vld [vmem:[#allocation13 + $0x8] sm:$0xff]
    %v1362 = vld [vmem:[#allocation13 + $0x10] sm:$0xff]
    %v1363 = vld [vmem:[#allocation13 + $0x18] sm:$0xff]
    %v1364 = vld [vmem:[#allocation13 + $0x20] sm:$0xff]
    %v1365 = vld [vmem:[#allocation13 + $0x28] sm:$0xff]
    %v1366 = vld [vmem:[#allocation13 + $0x30] sm:$0xff]
    %v1367 = vld [vmem:[#allocation13 + $0x38] sm:$0xff]
    %v1368 = vld [vmem:[#allocation13 + $0x40] sm:$0xff]
    %v1369 = vld [vmem:[#allocation13 + $0x48] sm:$0xff]
    %v1370 = vld [vmem:[#allocation13 + $0x50] sm:$0xff]
    %v1371 = vld [vmem:[#allocation13 + $0x58] sm:$0xff]
    %v1372 = vld [vmem:[#allocation13 + $0x60] sm:$0xff]
    %v1373 = vld [vmem:[#allocation13 + $0x68] sm:$0xff]
    %v1374 = vld [vmem:[#allocation13 + $0x70] sm:$0xff]
    %v1375 = vld [vmem:[#allocation13 + $0x78] sm:$0xff]
    %v1376 = vld [vmem:[#allocation13 + $0x80] sm:$0xff]
    %v1377 = vld [vmem:[#allocation13 + $0x88] sm:$0xff]
    %v1378 = vld [vmem:[#allocation13 + $0x90] sm:$0xff]
    %v1379 = vld [vmem:[#allocation13 + $0x98] sm:$0xff]
    %v1380 = vld [vmem:[#allocation13 + $0xa0] sm:$0xff]
    %v1381 = vld [vmem:[#allocation13 + $0xa8] sm:$0xff]
    %v1382 = vld [vmem:[#allocation13 + $0xb0] sm:$0xff]
    %v1383 = vld [vmem:[#allocation13 + $0xb8] sm:$0xff]
    %v1384 = vld [vmem:[#allocation13 + $0xc0] sm:$0xff]
    %v1385 = vld [vmem:[#allocation13 + $0xc8] sm:$0xff]
    %v1386 = vld [vmem:[#allocation13 + $0xd0] sm:$0xff]
    %v1387 = vld [vmem:[#allocation13 + $0xd8] sm:$0xff]
    %v1388 = vld [vmem:[#allocation13 + $0xe0] sm:$0xff]
    %v1389 = vld [vmem:[#allocation13 + $0xe8] sm:$0xff]
    %v1390 = vld [vmem:[#allocation13 + $0xf0] sm:$0xff]
    %v1391 = vld [vmem:[#allocation13 + $0xf8] sm:$0xff]
    %v1392 = vld [vmem:[#allocation13 + $0x100] sm:$0xff]
    %v1393 = vld [vmem:[#allocation13 + $0x108] sm:$0xff]
    %v1394 = vld [vmem:[#allocation13 + $0x110] sm:$0xff]
    %v1395 = vld [vmem:[#allocation13 + $0x118] sm:$0xff]
    %v1396 = vld [vmem:[#allocation13 + $0x120] sm:$0xff]
    %v1397 = vld [vmem:[#allocation13 + $0x128] sm:$0xff]
    %v1398 = vld [vmem:[#allocation13 + $0x130] sm:$0xff]
    %v1399 = vld [vmem:[#allocation13 + $0x138] sm:$0xff]
    %v1400 = vld [vmem:[#allocation13 + $0x140] sm:$0xff]
    %v1401 = vld [vmem:[#allocation13 + $0x148] sm:$0xff]
    %v1402 = vld [vmem:[#allocation13 + $0x150] sm:$0xff]
    %v1403 = vld [vmem:[#allocation13 + $0x158] sm:$0xff]
    %v1404 = vld [vmem:[#allocation13 + $0x160] sm:$0xff]
    %v1405 = vld [vmem:[#allocation13 + $0x168] sm:$0xff]
    %v1406 = vld [vmem:[#allocation13 + $0x170] sm:$0xff]
    %v1407 = vld [vmem:[#allocation13 + $0x178] sm:$0xff]
    %v1408 = vld [vmem:[#allocation13 + $0x180] sm:$0xff]
    %v1409 = vld [vmem:[#allocation13 + $0x188] sm:$0xff]
    %v1410 = vld [vmem:[#allocation13 + $0x190] sm:$0xff]
    %v1411 = vld [vmem:[#allocation13 + $0x198] sm:$0xff]
    %v1412 = vld [vmem:[#allocation13 + $0x1a0] sm:$0xff]
    %v1413 = vld [vmem:[#allocation13 + $0x1a8] sm:$0xff]
    %v1414 = vld [vmem:[#allocation13 + $0x1b0] sm:$0xff]
    %v1415 = vld [vmem:[#allocation13 + $0x1b8] sm:$0xff]
    %v1416 = vld [vmem:[#allocation13 + $0x1c0] sm:$0xff]
    %v1417 = vld [vmem:[#allocation13 + $0x1c8] sm:$0xff]
    %v1418 = vld [vmem:[#allocation13 + $0x1d0] sm:$0xff]
    %v1419 = vld [vmem:[#allocation13 + $0x1d8] sm:$0xff]
    %v1420 = vld [vmem:[#allocation13 + $0x1e0] sm:$0xff]
    %v1421 = vld [vmem:[#allocation13 + $0x1e8] sm:$0xff]
    %v1422 = vld [vmem:[#allocation13 + $0x1f0] sm:$0xff]
    %v1423 = vld [vmem:[#allocation13 + $0x1f8] sm:$0xff]
    %v1424 = vld [vmem:[#allocation13 + $0x200] sm:$0xff]
    %v1425 = vld [vmem:[#allocation13 + $0x208] sm:$0xff]
    %v1426 = vld [vmem:[#allocation13 + $0x210] sm:$0xff]
    %v1427 = vld [vmem:[#allocation13 + $0x218] sm:$0xff]
    %v1428 = vld [vmem:[#allocation13 + $0x220] sm:$0xff]
    %v1429 = vld [vmem:[#allocation13 + $0x228] sm:$0xff]
    %v1430 = vld [vmem:[#allocation13 + $0x230] sm:$0xff]
    %v1431 = vld [vmem:[#allocation13 + $0x238] sm:$0xff]
    %v1432 = vld [vmem:[#allocation13 + $0x240] sm:$0xff]
    %v1433 = vld [vmem:[#allocation13 + $0x248] sm:$0xff]
    %v1434 = vld [vmem:[#allocation13 + $0x250] sm:$0xff]
    %v1435 = vld [vmem:[#allocation13 + $0x258] sm:$0xff]
    %v1436 = vld [vmem:[#allocation13 + $0x260] sm:$0xff]
    %v1437 = vld [vmem:[#allocation13 + $0x268] sm:$0xff]
    %v1438 = vld [vmem:[#allocation13 + $0x270] sm:$0xff]
    %v1439 = vld [vmem:[#allocation13 + $0x278] sm:$0xff]
    %v1440 = vld [vmem:[#allocation13 + $0x280] sm:$0xff]
    %v1441 = vld [vmem:[#allocation13 + $0x288] sm:$0xff]
    %v1442 = vld [vmem:[#allocation13 + $0x290] sm:$0xff]
    %v1443 = vld [vmem:[#allocation13 + $0x298] sm:$0xff]
    %v1444 = vld [vmem:[#allocation13 + $0x2a0] sm:$0xff]
    %v1445 = vld [vmem:[#allocation13 + $0x2a8] sm:$0xff]
    %v1446 = vld [vmem:[#allocation13 + $0x2b0] sm:$0xff]
    %v1447 = vld [vmem:[#allocation13 + $0x2b8] sm:$0xff]
    %v1448 = vld [vmem:[#allocation13 + $0x2c0] sm:$0xff]
    %v1449 = vld [vmem:[#allocation13 + $0x2c8] sm:$0xff]
    %v1450 = vld [vmem:[#allocation13 + $0x2d0] sm:$0xff]
    %v1451 = vld [vmem:[#allocation13 + $0x2d8] sm:$0xff]
    %v1452 = vld [vmem:[#allocation13 + $0x2e0] sm:$0xff]
    %v1453 = vld [vmem:[#allocation13 + $0x2e8] sm:$0xff]
    %v1454 = vld [vmem:[#allocation13 + $0x2f0] sm:$0xff]
    %v1455 = vld [vmem:[#allocation13 + $0x2f8] sm:$0xff]
    %v1456 = vld [vmem:[#allocation13 + $0x300] sm:$0xff]
    %v1457 = vld [vmem:[#allocation13 + $0x308] sm:$0xff]
    %v1458 = vld [vmem:[#allocation13 + $0x310] sm:$0xff]
    %v1459 = vld [vmem:[#allocation13 + $0x318] sm:$0xff]
    %v1460 = vld [vmem:[#allocation13 + $0x320] sm:$0xff]
    %v1461 = vld [vmem:[#allocation13 + $0x328] sm:$0xff]
    %v1462 = vld [vmem:[#allocation13 + $0x330] sm:$0xff]
    %v1463 = vld [vmem:[#allocation13 + $0x338] sm:$0xff]
    %v1464 = vld [vmem:[#allocation13 + $0x340] sm:$0xff]
    %v1465 = vld [vmem:[#allocation13 + $0x348] sm:$0xff]
    %v1466 = vld [vmem:[#allocation13 + $0x350] sm:$0xff]
    %v1467 = vld [vmem:[#allocation13 + $0x358] sm:$0xff]
    %v1468 = vld [vmem:[#allocation13 + $0x360] sm:$0xff]
    %v1469 = vld [vmem:[#allocation13 + $0x368] sm:$0xff]
    %v1470 = vld [vmem:[#allocation13 + $0x370] sm:$0xff]
    %v1471 = vld [vmem:[#allocation13 + $0x378] sm:$0xff]
    %v1472 = vld [vmem:[#allocation13 + $0x380] sm:$0xff]
    %v1473 = vld [vmem:[#allocation13 + $0x388] sm:$0xff]
    %v1474 = vld [vmem:[#allocation13 + $0x390] sm:$0xff]
    %v1475 = vld [vmem:[#allocation13 + $0x398] sm:$0xff]
    %v1476 = vld [vmem:[#allocation13 + $0x3a0] sm:$0xff]
    %v1477 = vld [vmem:[#allocation13 + $0x3a8] sm:$0xff]
    %v1478 = vld [vmem:[#allocation13 + $0x3b0] sm:$0xff]
    %v1479 = vld [vmem:[#allocation13 + $0x3b8] sm:$0xff]
    %v1480 = vld [vmem:[#allocation13 + $0x3c0] sm:$0xff]
    %v1481 = vld [vmem:[#allocation13 + $0x3c8] sm:$0xff]
    %v1482 = vld [vmem:[#allocation13 + $0x3d0] sm:$0xff]
    %v1483 = vld [vmem:[#allocation13 + $0x3d8] sm:$0xff]
    %v1484 = vld [vmem:[#allocation13 + $0x3e0] sm:$0xff]
    %v1485 = vld [vmem:[#allocation13 + $0x3e8] sm:$0xff]
    %v1486 = vld [vmem:[#allocation13 + $0x3f0] sm:$0xff]
    %v1487 = vld [vmem:[#allocation13 + $0x3f8] sm:$0xff]
    %v1488 = vld [vmem:[#allocation13 + $0x400] sm:$0xff]
    %v1489 = vld [vmem:[#allocation13 + $0x408] sm:$0xff]
    %v1490 = vld [vmem:[#allocation13 + $0x410] sm:$0xff]
    %v1491 = vld [vmem:[#allocation13 + $0x418] sm:$0xff]
    %v1492 = vld [vmem:[#allocation13 + $0x420] sm:$0xff]
    %v1493 = vld [vmem:[#allocation13 + $0x428] sm:$0xff]
    %v1494 = vld [vmem:[#allocation13 + $0x430] sm:$0xff]
    %v1495 = vld [vmem:[#allocation13 + $0x438] sm:$0xff]
    %v1496 = vld [vmem:[#allocation13 + $0x440] sm:$0xff]
    %v1497 = vld [vmem:[#allocation13 + $0x448] sm:$0xff]
    %v1498 = vld [vmem:[#allocation13 + $0x450] sm:$0xff]
    %v1499 = vld [vmem:[#allocation13 + $0x458] sm:$0xff]
    %v1500 = vld [vmem:[#allocation13 + $0x460] sm:$0xff]
    %v1501 = vld [vmem:[#allocation13 + $0x468] sm:$0xff]
    %v1502 = vld [vmem:[#allocation13 + $0x470] sm:$0xff]
    %v1503 = vld [vmem:[#allocation13 + $0x478] sm:$0xff]
    %v1504 = vld [vmem:[#allocation13 + $0x480] sm:$0xff]
    %v1505 = vld [vmem:[#allocation13 + $0x488] sm:$0xff]
    %v1506 = vld [vmem:[#allocation13 + $0x490] sm:$0xff]
    %v1507 = vld [vmem:[#allocation13 + $0x498] sm:$0xff]
    %v1508 = vld [vmem:[#allocation13 + $0x4a0] sm:$0xff]
    %v1509 = vld [vmem:[#allocation13 + $0x4a8] sm:$0xff]
    %v1510 = vld [vmem:[#allocation13 + $0x4b0] sm:$0xff]
    %v1511 = vld [vmem:[#allocation13 + $0x4b8] sm:$0xff]
    %v1512 = vld [vmem:[#allocation13 + $0x4c0] sm:$0xff]
    %v1513 = vld [vmem:[#allocation13 + $0x4c8] sm:$0xff]
    %v1514 = vld [vmem:[#allocation13 + $0x4d0] sm:$0xff]
    %v1515 = vld [vmem:[#allocation13 + $0x4d8] sm:$0xff]
    %v1516 = vld [vmem:[#allocation13 + $0x4e0] sm:$0xff]
    %v1517 = vld [vmem:[#allocation13 + $0x4e8] sm:$0xff]
    %v1518 = vld [vmem:[#allocation13 + $0x4f0] sm:$0xff]
    %v1519 = vld [vmem:[#allocation13 + $0x4f8] sm:$0xff]
    %v1520 = vld [vmem:[#allocation13 + $0x500] sm:$0xff]
    %v1521 = vld [vmem:[#allocation13 + $0x508] sm:$0xff]
    %v1522 = vld [vmem:[#allocation13 + $0x510] sm:$0xff]
    %v1523 = vld [vmem:[#allocation13 + $0x518] sm:$0xff]
    %v1524 = vld [vmem:[#allocation13 + $0x520] sm:$0xff]
    %v1525 = vld [vmem:[#allocation13 + $0x528] sm:$0xff]
    %v1526 = vld [vmem:[#allocation13 + $0x530] sm:$0xff]
    %v1527 = vld [vmem:[#allocation13 + $0x538] sm:$0xff]
    %v1528 = vld [vmem:[#allocation13 + $0x540] sm:$0xff]
    %v1529 = vld [vmem:[#allocation13 + $0x548] sm:$0xff]
    %v1530 = vld [vmem:[#allocation13 + $0x550] sm:$0xff]
    %v1531 = vld [vmem:[#allocation13 + $0x558] sm:$0xff]
    %v1532 = vld [vmem:[#allocation13 + $0x560] sm:$0xff]
    %v1533 = vld [vmem:[#allocation13 + $0x568] sm:$0xff]
    %v1534 = vld [vmem:[#allocation13 + $0x570] sm:$0xff]
    %v1535 = vld [vmem:[#allocation13 + $0x578] sm:$0xff]
    %v1536 = vld [vmem:[#allocation13 + $0x580] sm:$0xff]
    %v1537 = vld [vmem:[#allocation13 + $0x588] sm:$0xff]
    %v1538 = vld [vmem:[#allocation13 + $0x590] sm:$0xff]
    %v1539 = vld [vmem:[#allocation13 + $0x598] sm:$0xff]
    %v1540 = vld [vmem:[#allocation13 + $0x5a0] sm:$0xff]
    %v1541 = vld [vmem:[#allocation13 + $0x5a8] sm:$0xff]
    %v1542 = vld [vmem:[#allocation13 + $0x5b0] sm:$0xff]
    %v1543 = vld [vmem:[#allocation13 + $0x5b8] sm:$0xff]
    %v1544 = vld [vmem:[#allocation13 + $0x5c0] sm:$0xff]
    %v1545 = vld [vmem:[#allocation13 + $0x5c8] sm:$0xff]
    %v1546 = vld [vmem:[#allocation13 + $0x5d0] sm:$0xff]
    %v1547 = vld [vmem:[#allocation13 + $0x5d8] sm:$0xff]
    %v1548 = vld [vmem:[#allocation13 + $0x5e0] sm:$0xff]
    %v1549 = vld [vmem:[#allocation13 + $0x5e8] sm:$0xff]
    %v1550 = vld [vmem:[#allocation13 + $0x5f0] sm:$0xff]
    %v1551 = vld [vmem:[#allocation13 + $0x5f8] sm:$0xff]
    %v1552 = vld [vmem:[#allocation13 + $0x600] sm:$0xff]
    %v1553 = vld [vmem:[#allocation13 + $0x608] sm:$0xff]
    %v1554 = vld [vmem:[#allocation13 + $0x610] sm:$0xff]
    %v1555 = vld [vmem:[#allocation13 + $0x618] sm:$0xff]
    %v1556 = vld [vmem:[#allocation13 + $0x620] sm:$0xff]
    %v1557 = vld [vmem:[#allocation13 + $0x628] sm:$0xff]
    %v1558 = vld [vmem:[#allocation13 + $0x630] sm:$0xff]
    %v1559 = vld [vmem:[#allocation13 + $0x638] sm:$0xff]
    %v1560 = vld [vmem:[#allocation13 + $0x640] sm:$0xff]
    %v1561 = vld [vmem:[#allocation13 + $0x648] sm:$0xff]
    %v1562 = vld [vmem:[#allocation13 + $0x650] sm:$0xff]
    %v1563 = vld [vmem:[#allocation13 + $0x658] sm:$0xff]
    %v1564 = vld [vmem:[#allocation13 + $0x660] sm:$0xff]
    %v1565 = vld [vmem:[#allocation13 + $0x668] sm:$0xff]
    %v1566 = vld [vmem:[#allocation13 + $0x670] sm:$0xff]
    %v1567 = vld [vmem:[#allocation13 + $0x678] sm:$0xff]
    %v1568 = vld [vmem:[#allocation13 + $0x680] sm:$0xff]
    %v1569 = vld [vmem:[#allocation13 + $0x688] sm:$0xff]
    %v1570 = vld [vmem:[#allocation13 + $0x690] sm:$0xff]
    %v1571 = vld [vmem:[#allocation13 + $0x698] sm:$0xff]
    %v1572 = vld [vmem:[#allocation13 + $0x6a0] sm:$0xff]
    %v1573 = vld [vmem:[#allocation13 + $0x6a8] sm:$0xff]
    %v1574 = vld [vmem:[#allocation13 + $0x6b0] sm:$0xff]
    %v1575 = vld [vmem:[#allocation13 + $0x6b8] sm:$0xff]
    %v1576 = vld [vmem:[#allocation13 + $0x6c0] sm:$0xff]
    %v1577 = vld [vmem:[#allocation13 + $0x6c8] sm:$0xff]
    %v1578 = vld [vmem:[#allocation13 + $0x6d0] sm:$0xff]
    %v1579 = vld [vmem:[#allocation13 + $0x6d8] sm:$0xff]
    %v1580 = vld [vmem:[#allocation13 + $0x6e0] sm:$0xff]
    %v1581 = vld [vmem:[#allocation13 + $0x6e8] sm:$0xff]
    %v1582 = vld [vmem:[#allocation13 + $0x6f0] sm:$0xff]
    %v1583 = vld [vmem:[#allocation13 + $0x6f8] sm:$0xff]
    %v1584 = vld [vmem:[#allocation13 + $0x700] sm:$0xff]
    %v1585 = vld [vmem:[#allocation13 + $0x708] sm:$0xff]
    %v1586 = vld [vmem:[#allocation13 + $0x710] sm:$0xff]
    %v1587 = vld [vmem:[#allocation13 + $0x718] sm:$0xff]
    %v1588 = vld [vmem:[#allocation13 + $0x720] sm:$0xff]
    %v1589 = vld [vmem:[#allocation13 + $0x728] sm:$0xff]
    %v1590 = vld [vmem:[#allocation13 + $0x730] sm:$0xff]
    %v1591 = vld [vmem:[#allocation13 + $0x738] sm:$0xff]
    %v1592 = vld [vmem:[#allocation13 + $0x740] sm:$0xff]
    %v1593 = vld [vmem:[#allocation13 + $0x748] sm:$0xff]
    %v1594 = vld [vmem:[#allocation13 + $0x750] sm:$0xff]
    %v1595 = vld [vmem:[#allocation13 + $0x758] sm:$0xff]
    %v1596 = vld [vmem:[#allocation13 + $0x760] sm:$0xff]
    %v1597 = vld [vmem:[#allocation13 + $0x768] sm:$0xff]
    %v1598 = vld [vmem:[#allocation13 + $0x770] sm:$0xff]
    %v1599 = vld [vmem:[#allocation13 + $0x778] sm:$0xff]
    %v1600 = vld [vmem:[#allocation13 + $0x780] sm:$0xff]
    %v1601 = vld [vmem:[#allocation13 + $0x788] sm:$0xff]
    %v1602 = vld [vmem:[#allocation13 + $0x790] sm:$0xff]
    %v1603 = vld [vmem:[#allocation13 + $0x798] sm:$0xff]
    %v1604 = vld [vmem:[#allocation13 + $0x7a0] sm:$0xff]
    %v1605 = vld [vmem:[#allocation13 + $0x7a8] sm:$0xff]
    %v1606 = vld [vmem:[#allocation13 + $0x7b0] sm:$0xff]
    %v1607 = vld [vmem:[#allocation13 + $0x7b8] sm:$0xff]
    %v1608 = vld [vmem:[#allocation13 + $0x7c0] sm:$0xff]
    %v1609 = vld [vmem:[#allocation13 + $0x7c8] sm:$0xff]
    %v1610 = vld [vmem:[#allocation13 + $0x7d0] sm:$0xff]
    %v1611 = vld [vmem:[#allocation13 + $0x7d8] sm:$0xff]
    %v1612 = vld [vmem:[#allocation13 + $0x7e0] sm:$0xff]
    %v1613 = vld [vmem:[#allocation13 + $0x7e8] sm:$0xff]
    %v1614 = vld [vmem:[#allocation13 + $0x7f0] sm:$0xff]
    %v1615 = vld [vmem:[#allocation13 + $0x7f8] sm:$0xff]
    %v1616 = vld [vmem:[#allocation13 + $0x800] sm:$0xff]
    %v1617 = vld [vmem:[#allocation13 + $0x808] sm:$0xff]
    %v1618 = vld [vmem:[#allocation13 + $0x810] sm:$0xff]
    %v1619 = vld [vmem:[#allocation13 + $0x818] sm:$0xff]
    %v1620 = vld [vmem:[#allocation13 + $0x820] sm:$0xff]
    %v1621 = vld [vmem:[#allocation13 + $0x828] sm:$0xff]
    %v1622 = vld [vmem:[#allocation13 + $0x830] sm:$0xff]
    %v1623 = vld [vmem:[#allocation13 + $0x838] sm:$0xff]
    %v1624 = vld [vmem:[#allocation13 + $0x840] sm:$0xff]
    %v1625 = vld [vmem:[#allocation13 + $0x848] sm:$0xff]
    %v1626 = vld [vmem:[#allocation13 + $0x850] sm:$0xff]
    %v1627 = vld [vmem:[#allocation13 + $0x858] sm:$0xff]
    %v1628 = vld [vmem:[#allocation13 + $0x860] sm:$0xff]
    %v1629 = vld [vmem:[#allocation13 + $0x868] sm:$0xff]
    %v1630 = vld [vmem:[#allocation13 + $0x870] sm:$0xff]
    %v1631 = vld [vmem:[#allocation13 + $0x878] sm:$0xff]
    %v1632 = vld [vmem:[#allocation13 + $0x880] sm:$0xff]
    %v1633 = vld [vmem:[#allocation13 + $0x888] sm:$0xff]
    %v1634 = vld [vmem:[#allocation13 + $0x890] sm:$0xff]
    %v1635 = vld [vmem:[#allocation13 + $0x898] sm:$0xff]
    %v1636 = vld [vmem:[#allocation13 + $0x8a0] sm:$0xff]
    %v1637 = vld [vmem:[#allocation13 + $0x8a8] sm:$0xff]
    %v1638 = vld [vmem:[#allocation13 + $0x8b0] sm:$0xff]
    %v1639 = vld [vmem:[#allocation13 + $0x8b8] sm:$0xff]
    %v1640 = vld [vmem:[#allocation13 + $0x8c0] sm:$0xff]
    %v1641 = vld [vmem:[#allocation13 + $0x8c8] sm:$0xff]
    %v1642 = vld [vmem:[#allocation13 + $0x8d0] sm:$0xff]
    %v1643 = vld [vmem:[#allocation13 + $0x8d8] sm:$0xff]
    %v1644 = vld [vmem:[#allocation13 + $0x8e0] sm:$0xff]
    %v1645 = vld [vmem:[#allocation13 + $0x8e8] sm:$0xff]
    %v1646 = vld [vmem:[#allocation13 + $0x8f0] sm:$0xff]
    %v1647 = vld [vmem:[#allocation13 + $0x8f8] sm:$0xff]
    %vm1936 = vcmask 1044480
    %v1937 = vrot.slane %v1360, 3
    %v1938 = vrot.slane %v1361, 3
    %v1939 = vrot.slane %v1362, 3
    %v1940 = vrot.slane %v1363, 3
    %v1941 = vrot.slane %v1364, 3
    %v1942 = vsel %vm1936, %v1937, %v1941
    %v1943 = vrot.slane %v1365, 3
    %v1944 = vsel %vm1936, %v1938, %v1943
    %v1945 = vrot.slane %v1366, 3
    %v1946 = vsel %vm1936, %v1939, %v1945
    %v1947 = vrot.slane %v1367, 3
    %v1948 = vsel %vm1936, %v1940, %v1947
    %v1949 = vrot.slane %v1368, 3
    %v1950 = vsel %vm1936, %v1941, %v1949
    %v1951 = vrot.slane %v1369, 3
    %v1952 = vsel %vm1936, %v1943, %v1951
    %v1953 = vrot.slane %v1370, 3
    %v1954 = vsel %vm1936, %v1945, %v1953
    %v1955 = vrot.slane %v1371, 3
    %v1956 = vsel %vm1936, %v1947, %v1955
    %v1957 = vrot.slane %v1372, 3
    %v1958 = vsel %vm1936, %v1949, %v1957
    %v1959 = vrot.slane %v1373, 3
    %v1960 = vsel %vm1936, %v1951, %v1959
    %v1961 = vrot.slane %v1374, 3
    %v1962 = vsel %vm1936, %v1953, %v1961
    %v1963 = vrot.slane %v1375, 3
    %v1964 = vsel %vm1936, %v1955, %v1963
    %v1965 = vrot.slane %v1376, 3
    %v1966 = vsel %vm1936, %v1957, %v1965
    %v1967 = vrot.slane %v1377, 3
    %v1968 = vsel %vm1936, %v1959, %v1967
    %v1969 = vrot.slane %v1378, 3
    %v1970 = vsel %vm1936, %v1961, %v1969
    %v1971 = vrot.slane %v1379, 3
    %v1972 = vsel %vm1936, %v1963, %v1971
    %v1973 = vrot.slane %v1380, 3
    %v1974 = vsel %vm1936, %v1965, %v1973
    %v1975 = vrot.slane %v1381, 3
    %v1976 = vsel %vm1936, %v1967, %v1975
    %v1977 = vrot.slane %v1382, 3
    %v1978 = vsel %vm1936, %v1969, %v1977
    %v1979 = vrot.slane %v1383, 3
    %v1980 = vsel %vm1936, %v1971, %v1979
    %v1981 = vrot.slane %v1384, 3
    %v1982 = vsel %vm1936, %v1973, %v1981
    %v1983 = vrot.slane %v1385, 3
    %v1984 = vsel %vm1936, %v1975, %v1983
    %v1985 = vrot.slane %v1386, 3
    %v1986 = vsel %vm1936, %v1977, %v1985
    %v1987 = vrot.slane %v1387, 3
    %v1988 = vsel %vm1936, %v1979, %v1987
    %v1989 = vrot.slane %v1388, 3
    %v1990 = vsel %vm1936, %v1981, %v1989
    %v1991 = vrot.slane %v1389, 3
    %v1992 = vsel %vm1936, %v1983, %v1991
    %v1993 = vrot.slane %v1390, 3
    %v1994 = vsel %vm1936, %v1985, %v1993
    %v1995 = vrot.slane %v1391, 3
    %v1996 = vsel %vm1936, %v1987, %v1995
    %v1997 = vrot.slane %v1392, 3
    %v1998 = vsel %vm1936, %v1989, %v1997
    %v1999 = vrot.slane %v1393, 3
    %v2000 = vsel %vm1936, %v1991, %v1999
    %v2001 = vrot.slane %v1394, 3
    %v2002 = vsel %vm1936, %v1993, %v2001
    %v2003 = vrot.slane %v1395, 3
    %v2004 = vsel %vm1936, %v1995, %v2003
    %v2005 = vrot.slane %v1396, 3
    %v2006 = vrot.slane %v1397, 3
    %v2007 = vrot.slane %v1398, 3
    %v2008 = vrot.slane %v1399, 3
    %v2009 = vrot.slane %v1400, 3
    %v2010 = vsel %vm1936, %v2005, %v2009
    %v2011 = vrot.slane %v1401, 3
    %v2012 = vsel %vm1936, %v2006, %v2011
    %v2013 = vrot.slane %v1402, 3
    %v2014 = vsel %vm1936, %v2007, %v2013
    %v2015 = vrot.slane %v1403, 3
    %v2016 = vsel %vm1936, %v2008, %v2015
    %v2017 = vrot.slane %v1404, 3
    %v2018 = vsel %vm1936, %v2009, %v2017
    %v2019 = vrot.slane %v1405, 3
    %v2020 = vsel %vm1936, %v2011, %v2019
    %v2021 = vrot.slane %v1406, 3
    %v2022 = vsel %vm1936, %v2013, %v2021
    %v2023 = vrot.slane %v1407, 3
    %v2024 = vsel %vm1936, %v2015, %v2023
    %v2025 = vrot.slane %v1408, 3
    %v2026 = vsel %vm1936, %v2017, %v2025
    %v2027 = vrot.slane %v1409, 3
    %v2028 = vsel %vm1936, %v2019, %v2027
    %v2029 = vrot.slane %v1410, 3
    %v2030 = vsel %vm1936, %v2021, %v2029
    %v2031 = vrot.slane %v1411, 3
    %v2032 = vsel %vm1936, %v2023, %v2031
    %v2033 = vrot.slane %v1412, 3
    %v2034 = vsel %vm1936, %v2025, %v2033
    %v2035 = vrot.slane %v1413, 3
    %v2036 = vsel %vm1936, %v2027, %v2035
    %v2037 = vrot.slane %v1414, 3
    %v2038 = vsel %vm1936, %v2029, %v2037
    %v2039 = vrot.slane %v1415, 3
    %v2040 = vsel %vm1936, %v2031, %v2039
    %v2041 = vrot.slane %v1416, 3
    %v2042 = vsel %vm1936, %v2033, %v2041
    %v2043 = vrot.slane %v1417, 3
    %v2044 = vsel %vm1936, %v2035, %v2043
    %v2045 = vrot.slane %v1418, 3
    %v2046 = vsel %vm1936, %v2037, %v2045
    %v2047 = vrot.slane %v1419, 3
    %v2048 = vsel %vm1936, %v2039, %v2047
    %v2049 = vrot.slane %v1420, 3
    %v2050 = vsel %vm1936, %v2041, %v2049
    %v2051 = vrot.slane %v1421, 3
    %v2052 = vsel %vm1936, %v2043, %v2051
    %v2053 = vrot.slane %v1422, 3
    %v2054 = vsel %vm1936, %v2045, %v2053
    %v2055 = vrot.slane %v1423, 3
    %v2056 = vsel %vm1936, %v2047, %v2055
    %v2057 = vrot.slane %v1424, 3
    %v2058 = vsel %vm1936, %v2049, %v2057
    %v2059 = vrot.slane %v1425, 3
    %v2060 = vsel %vm1936, %v2051, %v2059
    %v2061 = vrot.slane %v1426, 3
    %v2062 = vsel %vm1936, %v2053, %v2061
    %v2063 = vrot.slane %v1427, 3
    %v2064 = vsel %vm1936, %v2055, %v2063
    %v2065 = vrot.slane %v1428, 3
    %v2066 = vsel %vm1936, %v2057, %v2065
    %v2067 = vrot.slane %v1429, 3
    %v2068 = vsel %vm1936, %v2059, %v2067
    %v2069 = vrot.slane %v1430, 3
    %v2070 = vsel %vm1936, %v2061, %v2069
    %v2071 = vrot.slane %v1431, 3
    %v2072 = vsel %vm1936, %v2063, %v2071
    %v2073 = vrot.slane %v1432, 3
    %v2074 = vrot.slane %v1433, 3
    %v2075 = vrot.slane %v1434, 3
    %v2076 = vrot.slane %v1435, 3
    %v2077 = vrot.slane %v1436, 3
    %v2078 = vsel %vm1936, %v2073, %v2077
    %v2079 = vrot.slane %v1437, 3
    %v2080 = vsel %vm1936, %v2074, %v2079
    %v2081 = vrot.slane %v1438, 3
    %v2082 = vsel %vm1936, %v2075, %v2081
    %v2083 = vrot.slane %v1439, 3
    %v2084 = vsel %vm1936, %v2076, %v2083
    %v2085 = vrot.slane %v1440, 3
    %v2086 = vsel %vm1936, %v2077, %v2085
    %v2087 = vrot.slane %v1441, 3
    %v2088 = vsel %vm1936, %v2079, %v2087
    %v2089 = vrot.slane %v1442, 3
    %v2090 = vsel %vm1936, %v2081, %v2089
    %v2091 = vrot.slane %v1443, 3
    %v2092 = vsel %vm1936, %v2083, %v2091
    %v2093 = vrot.slane %v1444, 3
    %v2094 = vsel %vm1936, %v2085, %v2093
    %v2095 = vrot.slane %v1445, 3
    %v2096 = vsel %vm1936, %v2087, %v2095
    %v2097 = vrot.slane %v1446, 3
    %v2098 = vsel %vm1936, %v2089, %v2097
    %v2099 = vrot.slane %v1447, 3
    %v2100 = vsel %vm1936, %v2091, %v2099
    %v2101 = vrot.slane %v1448, 3
    %v2102 = vsel %vm1936, %v2093, %v2101
    %v2103 = vrot.slane %v1449, 3
    %v2104 = vsel %vm1936, %v2095, %v2103
    %v2105 = vrot.slane %v1450, 3
    %v2106 = vsel %vm1936, %v2097, %v2105
    %v2107 = vrot.slane %v1451, 3
    %v2108 = vsel %vm1936, %v2099, %v2107
    %v2109 = vrot.slane %v1452, 3
    %v2110 = vsel %vm1936, %v2101, %v2109
    %v2111 = vrot.slane %v1453, 3
    %v2112 = vsel %vm1936, %v2103, %v2111
    %v2113 = vrot.slane %v1454, 3
    %v2114 = vsel %vm1936, %v2105, %v2113
    %v2115 = vrot.slane %v1455, 3
    %v2116 = vsel %vm1936, %v2107, %v2115
    %v2117 = vrot.slane %v1456, 3
    %v2118 = vsel %vm1936, %v2109, %v2117
    %v2119 = vrot.slane %v1457, 3
    %v2120 = vsel %vm1936, %v2111, %v2119
    %v2121 = vrot.slane %v1458, 3
    %v2122 = vsel %vm1936, %v2113, %v2121
    %v2123 = vrot.slane %v1459, 3
    %v2124 = vsel %vm1936, %v2115, %v2123
    %v2125 = vrot.slane %v1460, 3
    %v2126 = vsel %vm1936, %v2117, %v2125
    %v2127 = vrot.slane %v1461, 3
    %v2128 = vsel %vm1936, %v2119, %v2127
    %v2129 = vrot.slane %v1462, 3
    %v2130 = vsel %vm1936, %v2121, %v2129
    %v2131 = vrot.slane %v1463, 3
    %v2132 = vsel %vm1936, %v2123, %v2131
    %v2133 = vrot.slane %v1464, 3
    %v2134 = vsel %vm1936, %v2125, %v2133
    %v2135 = vrot.slane %v1465, 3
    %v2136 = vsel %vm1936, %v2127, %v2135
    %v2137 = vrot.slane %v1466, 3
    %v2138 = vsel %vm1936, %v2129, %v2137
    %v2139 = vrot.slane %v1467, 3
    %v2140 = vsel %vm1936, %v2131, %v2139
    %v2141 = vrot.slane %v1468, 3
    %v2142 = vrot.slane %v1469, 3
    %v2143 = vrot.slane %v1470, 3
    %v2144 = vrot.slane %v1471, 3
    %v2145 = vrot.slane %v1472, 3
    %v2146 = vsel %vm1936, %v2141, %v2145
    %v2147 = vrot.slane %v1473, 3
    %v2148 = vsel %vm1936, %v2142, %v2147
    %v2149 = vrot.slane %v1474, 3
    %v2150 = vsel %vm1936, %v2143, %v2149
    %v2151 = vrot.slane %v1475, 3
    %v2152 = vsel %vm1936, %v2144, %v2151
    %v2153 = vrot.slane %v1476, 3
    %v2154 = vsel %vm1936, %v2145, %v2153
    %v2155 = vrot.slane %v1477, 3
    %v2156 = vsel %vm1936, %v2147, %v2155
    %v2157 = vrot.slane %v1478, 3
    %v2158 = vsel %vm1936, %v2149, %v2157
    %v2159 = vrot.slane %v1479, 3
    %v2160 = vsel %vm1936, %v2151, %v2159
    %v2161 = vrot.slane %v1480, 3
    %v2162 = vsel %vm1936, %v2153, %v2161
    %v2163 = vrot.slane %v1481, 3
    %v2164 = vsel %vm1936, %v2155, %v2163
    %v2165 = vrot.slane %v1482, 3
    %v2166 = vsel %vm1936, %v2157, %v2165
    %v2167 = vrot.slane %v1483, 3
    %v2168 = vsel %vm1936, %v2159, %v2167
    %v2169 = vrot.slane %v1484, 3
    %v2170 = vsel %vm1936, %v2161, %v2169
    %v2171 = vrot.slane %v1485, 3
    %v2172 = vsel %vm1936, %v2163, %v2171
    %v2173 = vrot.slane %v1486, 3
    %v2174 = vsel %vm1936, %v2165, %v2173
    %v2175 = vrot.slane %v1487, 3
    %v2176 = vsel %vm1936, %v2167, %v2175
    %v2177 = vrot.slane %v1488, 3
    %v2178 = vsel %vm1936, %v2169, %v2177
    %v2179 = vrot.slane %v1489, 3
    %v2180 = vsel %vm1936, %v2171, %v2179
    %v2181 = vrot.slane %v1490, 3
    %v2182 = vsel %vm1936, %v2173, %v2181
    %v2183 = vrot.slane %v1491, 3
    %v2184 = vsel %vm1936, %v2175, %v2183
    %v2185 = vrot.slane %v1492, 3
    %v2186 = vsel %vm1936, %v2177, %v2185
    %v2187 = vrot.slane %v1493, 3
    %v2188 = vsel %vm1936, %v2179, %v2187
    %v2189 = vrot.slane %v1494, 3
    %v2190 = vsel %vm1936, %v2181, %v2189
    %v2191 = vrot.slane %v1495, 3
    %v2192 = vsel %vm1936, %v2183, %v2191
    %v2193 = vrot.slane %v1496, 3
    %v2194 = vsel %vm1936, %v2185, %v2193
    %v2195 = vrot.slane %v1497, 3
    %v2196 = vsel %vm1936, %v2187, %v2195
    %v2197 = vrot.slane %v1498, 3
    %v2198 = vsel %vm1936, %v2189, %v2197
    %v2199 = vrot.slane %v1499, 3
    %v2200 = vsel %vm1936, %v2191, %v2199
    %v2201 = vrot.slane %v1500, 3
    %v2202 = vsel %vm1936, %v2193, %v2201
    %v2203 = vrot.slane %v1501, 3
    %v2204 = vsel %vm1936, %v2195, %v2203
    %v2205 = vrot.slane %v1502, 3
    %v2206 = vsel %vm1936, %v2197, %v2205
    %v2207 = vrot.slane %v1503, 3
    %v2208 = vsel %vm1936, %v2199, %v2207
    %v2209 = vrot.slane %v1504, 3
    %v2210 = vrot.slane %v1505, 3
    %v2211 = vrot.slane %v1506, 3
    %v2212 = vrot.slane %v1507, 3
    %v2213 = vrot.slane %v1508, 3
    %v2214 = vsel %vm1936, %v2209, %v2213
    %v2215 = vrot.slane %v1509, 3
    %v2216 = vsel %vm1936, %v2210, %v2215
    %v2217 = vrot.slane %v1510, 3
    %v2218 = vsel %vm1936, %v2211, %v2217
    %v2219 = vrot.slane %v1511, 3
    %v2220 = vsel %vm1936, %v2212, %v2219
    %v2221 = vrot.slane %v1512, 3
    %v2222 = vsel %vm1936, %v2213, %v2221
    %v2223 = vrot.slane %v1513, 3
    %v2224 = vsel %vm1936, %v2215, %v2223
    %v2225 = vrot.slane %v1514, 3
    %v2226 = vsel %vm1936, %v2217, %v2225
    %v2227 = vrot.slane %v1515, 3
    %v2228 = vsel %vm1936, %v2219, %v2227
    %v2229 = vrot.slane %v1516, 3
    %v2230 = vsel %vm1936, %v2221, %v2229
    %v2231 = vrot.slane %v1517, 3
    %v2232 = vsel %vm1936, %v2223, %v2231
    %v2233 = vrot.slane %v1518, 3
    %v2234 = vsel %vm1936, %v2225, %v2233
    %v2235 = vrot.slane %v1519, 3
    %v2236 = vsel %vm1936, %v2227, %v2235
    %v2237 = vrot.slane %v1520, 3
    %v2238 = vsel %vm1936, %v2229, %v2237
    %v2239 = vrot.slane %v1521, 3
    %v2240 = vsel %vm1936, %v2231, %v2239
    %v2241 = vrot.slane %v1522, 3
    %v2242 = vsel %vm1936, %v2233, %v2241
    %v2243 = vrot.slane %v1523, 3
    %v2244 = vsel %vm1936, %v2235, %v2243
    %v2245 = vrot.slane %v1524, 3
    %v2246 = vsel %vm1936, %v2237, %v2245
    %v2247 = vrot.slane %v1525, 3
    %v2248 = vsel %vm1936, %v2239, %v2247
    %v2249 = vrot.slane %v1526, 3
    %v2250 = vsel %vm1936, %v2241, %v2249
    %v2251 = vrot.slane %v1527, 3
    %v2252 = vsel %vm1936, %v2243, %v2251
    %v2253 = vrot.slane %v1528, 3
    %v2254 = vsel %vm1936, %v2245, %v2253
    %v2255 = vrot.slane %v1529, 3
    %v2256 = vsel %vm1936, %v2247, %v2255
    %v2257 = vrot.slane %v1530, 3
    %v2258 = vsel %vm1936, %v2249, %v2257
    %v2259 = vrot.slane %v1531, 3
    %v2260 = vsel %vm1936, %v2251, %v2259
    %v2261 = vrot.slane %v1532, 3
    %v2262 = vsel %vm1936, %v2253, %v2261
    %v2263 = vrot.slane %v1533, 3
    %v2264 = vsel %vm1936, %v2255, %v2263
    %v2265 = vrot.slane %v1534, 3
    %v2266 = vsel %vm1936, %v2257, %v2265
    %v2267 = vrot.slane %v1535, 3
    %v2268 = vsel %vm1936, %v2259, %v2267
    %v2269 = vrot.slane %v1536, 3
    %v2270 = vsel %vm1936, %v2261, %v2269
    %v2271 = vrot.slane %v1537, 3
    %v2272 = vsel %vm1936, %v2263, %v2271
    %v2273 = vrot.slane %v1538, 3
    %v2274 = vsel %vm1936, %v2265, %v2273
    %v2275 = vrot.slane %v1539, 3
    %v2276 = vsel %vm1936, %v2267, %v2275
    %v2277 = vrot.slane %v1540, 3
    %v2278 = vrot.slane %v1541, 3
    %v2279 = vrot.slane %v1542, 3
    %v2280 = vrot.slane %v1543, 3
    %v2281 = vrot.slane %v1544, 3
    %v2282 = vsel %vm1936, %v2277, %v2281
    %v2283 = vrot.slane %v1545, 3
    %v2284 = vsel %vm1936, %v2278, %v2283
    %v2285 = vrot.slane %v1546, 3
    %v2286 = vsel %vm1936, %v2279, %v2285
    %v2287 = vrot.slane %v1547, 3
    %v2288 = vsel %vm1936, %v2280, %v2287
    %v2289 = vrot.slane %v1548, 3
    %v2290 = vsel %vm1936, %v2281, %v2289
    %v2291 = vrot.slane %v1549, 3
    %v2292 = vsel %vm1936, %v2283, %v2291
    %v2293 = vrot.slane %v1550, 3
    %v2294 = vsel %vm1936, %v2285, %v2293
    %v2295 = vrot.slane %v1551, 3
    %v2296 = vsel %vm1936, %v2287, %v2295
    %v2297 = vrot.slane %v1552, 3
    %v2298 = vsel %vm1936, %v2289, %v2297
    %v2299 = vrot.slane %v1553, 3
    %v2300 = vsel %vm1936, %v2291, %v2299
    %v2301 = vrot.slane %v1554, 3
    %v2302 = vsel %vm1936, %v2293, %v2301
    %v2303 = vrot.slane %v1555, 3
    %v2304 = vsel %vm1936, %v2295, %v2303
    %v2305 = vrot.slane %v1556, 3
    %v2306 = vsel %vm1936, %v2297, %v2305
    %v2307 = vrot.slane %v1557, 3
    %v2308 = vsel %vm1936, %v2299, %v2307
    %v2309 = vrot.slane %v1558, 3
    %v2310 = vsel %vm1936, %v2301, %v2309
    %v2311 = vrot.slane %v1559, 3
    %v2312 = vsel %vm1936, %v2303, %v2311
    %v2313 = vrot.slane %v1560, 3
    %v2314 = vsel %vm1936, %v2305, %v2313
    %v2315 = vrot.slane %v1561, 3
    %v2316 = vsel %vm1936, %v2307, %v2315
    %v2317 = vrot.slane %v1562, 3
    %v2318 = vsel %vm1936, %v2309, %v2317
    %v2319 = vrot.slane %v1563, 3
    %v2320 = vsel %vm1936, %v2311, %v2319
    %v2321 = vrot.slane %v1564, 3
    %v2322 = vsel %vm1936, %v2313, %v2321
    %v2323 = vrot.slane %v1565, 3
    %v2324 = vsel %vm1936, %v2315, %v2323
    %v2325 = vrot.slane %v1566, 3
    %v2326 = vsel %vm1936, %v2317, %v2325
    %v2327 = vrot.slane %v1567, 3
    %v2328 = vsel %vm1936, %v2319, %v2327
    %v2329 = vrot.slane %v1568, 3
    %v2330 = vsel %vm1936, %v2321, %v2329
    %v2331 = vrot.slane %v1569, 3
    %v2332 = vsel %vm1936, %v2323, %v2331
    %v2333 = vrot.slane %v1570, 3
    %v2334 = vsel %vm1936, %v2325, %v2333
    %v2335 = vrot.slane %v1571, 3
    %v2336 = vsel %vm1936, %v2327, %v2335
    %v2337 = vrot.slane %v1572, 3
    %v2338 = vsel %vm1936, %v2329, %v2337
    %v2339 = vrot.slane %v1573, 3
    %v2340 = vsel %vm1936, %v2331, %v2339
    %v2341 = vrot.slane %v1574, 3
    %v2342 = vsel %vm1936, %v2333, %v2341
    %v2343 = vrot.slane %v1575, 3
    %v2344 = vsel %vm1936, %v2335, %v2343
    %v2345 = vrot.slane %v1576, 3
    %v2346 = vrot.slane %v1577, 3
    %v2347 = vrot.slane %v1578, 3
    %v2348 = vrot.slane %v1579, 3
    %v2349 = vrot.slane %v1580, 3
    %v2350 = vsel %vm1936, %v2345, %v2349
    %v2351 = vrot.slane %v1581, 3
    %v2352 = vsel %vm1936, %v2346, %v2351
    %v2353 = vrot.slane %v1582, 3
    %v2354 = vsel %vm1936, %v2347, %v2353
    %v2355 = vrot.slane %v1583, 3
    %v2356 = vsel %vm1936, %v2348, %v2355
    %v2357 = vrot.slane %v1584, 3
    %v2358 = vsel %vm1936, %v2349, %v2357
    %v2359 = vrot.slane %v1585, 3
    %v2360 = vsel %vm1936, %v2351, %v2359
    %v2361 = vrot.slane %v1586, 3
    %v2362 = vsel %vm1936, %v2353, %v2361
    %v2363 = vrot.slane %v1587, 3
    %v2364 = vsel %vm1936, %v2355, %v2363
    %v2365 = vrot.slane %v1588, 3
    %v2366 = vsel %vm1936, %v2357, %v2365
    %v2367 = vrot.slane %v1589, 3
    %v2368 = vsel %vm1936, %v2359, %v2367
    %v2369 = vrot.slane %v1590, 3
    %v2370 = vsel %vm1936, %v2361, %v2369
    %v2371 = vrot.slane %v1591, 3
    %v2372 = vsel %vm1936, %v2363, %v2371
    %v2373 = vrot.slane %v1592, 3
    %v2374 = vsel %vm1936, %v2365, %v2373
    %v2375 = vrot.slane %v1593, 3
    %v2376 = vsel %vm1936, %v2367, %v2375
    %v2377 = vrot.slane %v1594, 3
    %v2378 = vsel %vm1936, %v2369, %v2377
    %v2379 = vrot.slane %v1595, 3
    %v2380 = vsel %vm1936, %v2371, %v2379
    %v2381 = vrot.slane %v1596, 3
    %v2382 = vsel %vm1936, %v2373, %v2381
    %v2383 = vrot.slane %v1597, 3
    %v2384 = vsel %vm1936, %v2375, %v2383
    %v2385 = vrot.slane %v1598, 3
    %v2386 = vsel %vm1936, %v2377, %v2385
    %v2387 = vrot.slane %v1599, 3
    %v2388 = vsel %vm1936, %v2379, %v2387
    %v2389 = vrot.slane %v1600, 3
    %v2390 = vsel %vm1936, %v2381, %v2389
    %v2391 = vrot.slane %v1601, 3
    %v2392 = vsel %vm1936, %v2383, %v2391
    %v2393 = vrot.slane %v1602, 3
    %v2394 = vsel %vm1936, %v2385, %v2393
    %v2395 = vrot.slane %v1603, 3
    %v2396 = vsel %vm1936, %v2387, %v2395
    %v2397 = vrot.slane %v1604, 3
    %v2398 = vsel %vm1936, %v2389, %v2397
    %v2399 = vrot.slane %v1605, 3
    %v2400 = vsel %vm1936, %v2391, %v2399
    %v2401 = vrot.slane %v1606, 3
    %v2402 = vsel %vm1936, %v2393, %v2401
    %v2403 = vrot.slane %v1607, 3
    %v2404 = vsel %vm1936, %v2395, %v2403
    %v2405 = vrot.slane %v1608, 3
    %v2406 = vsel %vm1936, %v2397, %v2405
    %v2407 = vrot.slane %v1609, 3
    %v2408 = vsel %vm1936, %v2399, %v2407
    %v2409 = vrot.slane %v1610, 3
    %v2410 = vsel %vm1936, %v2401, %v2409
    %v2411 = vrot.slane %v1611, 3
    %v2412 = vsel %vm1936, %v2403, %v2411
    %v2413 = vrot.slane %v1612, 3
    %v2414 = vrot.slane %v1613, 3
    %v2415 = vrot.slane %v1614, 3
    %v2416 = vrot.slane %v1615, 3
    %v2417 = vrot.slane %v1616, 3
    %v2418 = vsel %vm1936, %v2413, %v2417
    %v2419 = vrot.slane %v1617, 3
    %v2420 = vsel %vm1936, %v2414, %v2419
    %v2421 = vrot.slane %v1618, 3
    %v2422 = vsel %vm1936, %v2415, %v2421
    %v2423 = vrot.slane %v1619, 3
    %v2424 = vsel %vm1936, %v2416, %v2423
    %v2425 = vrot.slane %v1620, 3
    %v2426 = vsel %vm1936, %v2417, %v2425
    %v2427 = vrot.slane %v1621, 3
    %v2428 = vsel %vm1936, %v2419, %v2427
    %v2429 = vrot.slane %v1622, 3
    %v2430 = vsel %vm1936, %v2421, %v2429
    %v2431 = vrot.slane %v1623, 3
    %v2432 = vsel %vm1936, %v2423, %v2431
    %v2433 = vrot.slane %v1624, 3
    %v2434 = vsel %vm1936, %v2425, %v2433
    %v2435 = vrot.slane %v1625, 3
    %v2436 = vsel %vm1936, %v2427, %v2435
    %v2437 = vrot.slane %v1626, 3
    %v2438 = vsel %vm1936, %v2429, %v2437
    %v2439 = vrot.slane %v1627, 3
    %v2440 = vsel %vm1936, %v2431, %v2439
    %v2441 = vrot.slane %v1628, 3
    %v2442 = vsel %vm1936, %v2433, %v2441
    %v2443 = vrot.slane %v1629, 3
    %v2444 = vsel %vm1936, %v2435, %v2443
    %v2445 = vrot.slane %v1630, 3
    %v2446 = vsel %vm1936, %v2437, %v2445
    %v2447 = vrot.slane %v1631, 3
    %v2448 = vsel %vm1936, %v2439, %v2447
    %v2449 = vrot.slane %v1632, 3
    %v2450 = vsel %vm1936, %v2441, %v2449
    %v2451 = vrot.slane %v1633, 3
    %v2452 = vsel %vm1936, %v2443, %v2451
    %v2453 = vrot.slane %v1634, 3
    %v2454 = vsel %vm1936, %v2445, %v2453
    %v2455 = vrot.slane %v1635, 3
    %v2456 = vsel %vm1936, %v2447, %v2455
    %v2457 = vrot.slane %v1636, 3
    %v2458 = vsel %vm1936, %v2449, %v2457
    %v2459 = vrot.slane %v1637, 3
    %v2460 = vsel %vm1936, %v2451, %v2459
    %v2461 = vrot.slane %v1638, 3
    %v2462 = vsel %vm1936, %v2453, %v2461
    %v2463 = vrot.slane %v1639, 3
    %v2464 = vsel %vm1936, %v2455, %v2463
    %v2465 = vrot.slane %v1640, 3
    %v2466 = vsel %vm1936, %v2457, %v2465
    %v2467 = vrot.slane %v1641, 3
    %v2468 = vsel %vm1936, %v2459, %v2467
    %v2469 = vrot.slane %v1642, 3
    %v2470 = vsel %vm1936, %v2461, %v2469
    %v2471 = vrot.slane %v1643, 3
    %v2472 = vsel %vm1936, %v2463, %v2471
    %v2473 = vrot.slane %v1644, 3
    %v2474 = vsel %vm1936, %v2465, %v2473
    %v2475 = vrot.slane %v1645, 3
    %v2476 = vsel %vm1936, %v2467, %v2475
    %v2477 = vrot.slane %v1646, 3
    %v2478 = vsel %vm1936, %v2469, %v2477
    %v2479 = vrot.slane %v1647, 3
    %v2480 = vsel %vm1936, %v2471, %v2479
    %2801 = vst [vmem:[%s8] sm:$0xe0] %v1937
    %2802 = vst [vmem:[%s8 + $0x8] sm:$0xe0] %v1938
    %2803 = vst [vmem:[%s8 + $0x10] sm:$0xe0] %v1939
    %2804 = vst [vmem:[%s8 + $0x18] sm:$0xe0] %v1940
    %2805 = vst [vmem:[%s8 + $0x20] sm:$0xff] %v1942
    %2806 = vst [vmem:[%s8 + $0x28] sm:$0xff] %v1944
    %2807 = vst [vmem:[%s8 + $0x30] sm:$0xff] %v1946
    %2808 = vst [vmem:[%s8 + $0x38] sm:$0xff] %v1948
    %2809 = vst [vmem:[%s8 + $0x40] sm:$0xff] %v1950
    %2810 = vst [vmem:[%s8 + $0x48] sm:$0xff] %v1952
    %2811 = vst [vmem:[%s8 + $0x50] sm:$0xff] %v1954
    %2812 = vst [vmem:[%s8 + $0x58] sm:$0xff] %v1956
    %2813 = vst [vmem:[%s8 + $0x60] sm:$0xff] %v1958
    %2814 = vst [vmem:[%s8 + $0x68] sm:$0xff] %v1960
    %2815 = vst [vmem:[%s8 + $0x70] sm:$0xff] %v1962
    %2816 = vst [vmem:[%s8 + $0x78] sm:$0xff] %v1964
    %2817 = vst [vmem:[%s8 + $0x80] sm:$0xff] %v1966
    %2818 = vst [vmem:[%s8 + $0x88] sm:$0xff] %v1968
    %2819 = vst [vmem:[%s8 + $0x90] sm:$0xff] %v1970
    %2820 = vst [vmem:[%s8 + $0x98] sm:$0xff] %v1972
    %2821 = vst [vmem:[%s8 + $0xa0] sm:$0xff] %v1974
    %2822 = vst [vmem:[%s8 + $0xa8] sm:$0xff] %v1976
    %2823 = vst [vmem:[%s8 + $0xb0] sm:$0xff] %v1978
    %2824 = vst [vmem:[%s8 + $0xb8] sm:$0xff] %v1980
    %2825 = vst [vmem:[%s8 + $0xc0] sm:$0xff] %v1982
    %2826 = vst [vmem:[%s8 + $0xc8] sm:$0xff] %v1984
    %2827 = vst [vmem:[%s8 + $0xd0] sm:$0xff] %v1986
    %2828 = vst [vmem:[%s8 + $0xd8] sm:$0xff] %v1988
    %2829 = vst [vmem:[%s8 + $0xe0] sm:$0xff] %v1990
    %2830 = vst [vmem:[%s8 + $0xe8] sm:$0xff] %v1992
    %2831 = vst [vmem:[%s8 + $0xf0] sm:$0xff] %v1994
    %2832 = vst [vmem:[%s8 + $0xf8] sm:$0xff] %v1996
    %2833 = vst [vmem:[%s8 + $0x100] sm:$0xff] %v1998
    %2834 = vst [vmem:[%s8 + $0x108] sm:$0xff] %v2000
    %2835 = vst [vmem:[%s8 + $0x110] sm:$0xff] %v2002
    %2836 = vst [vmem:[%s8 + $0x118] sm:$0xff] %v2004
    %2837 = vst [vmem:[%s8 + $0x120] sm:$0x1f] %v1997
    %2838 = vst [vmem:[%s8 + $0x128] sm:$0x1f] %v1999
    %2839 = vst [vmem:[%s8 + $0x130] sm:$0x1f] %v2001
    %2840 = vst [vmem:[%s8 + $0x138] sm:$0x1f] %v2003
    %2841 = vst [vmem:[%s8 + $0x140] sm:$0xe0] %v2005
    %2842 = vst [vmem:[%s8 + $0x148] sm:$0xe0] %v2006
    %2843 = vst [vmem:[%s8 + $0x150] sm:$0xe0] %v2007
    %2844 = vst [vmem:[%s8 + $0x158] sm:$0xe0] %v2008
    %2845 = vst [vmem:[%s8 + $0x160] sm:$0xff] %v2010
    %2846 = vst [vmem:[%s8 + $0x168] sm:$0xff] %v2012
    %2847 = vst [vmem:[%s8 + $0x170] sm:$0xff] %v2014
    %2848 = vst [vmem:[%s8 + $0x178] sm:$0xff] %v2016
    %2849 = vst [vmem:[%s8 + $0x180] sm:$0xff] %v2018
    %2850 = vst [vmem:[%s8 + $0x188] sm:$0xff] %v2020
    %2851 = vst [vmem:[%s8 + $0x190] sm:$0xff] %v2022
    %2852 = vst [vmem:[%s8 + $0x198] sm:$0xff] %v2024
    %2853 = vst [vmem:[%s8 + $0x1a0] sm:$0xff] %v2026
    %2854 = vst [vmem:[%s8 + $0x1a8] sm:$0xff] %v2028
    %2855 = vst [vmem:[%s8 + $0x1b0] sm:$0xff] %v2030
    %2856 = vst [vmem:[%s8 + $0x1b8] sm:$0xff] %v2032
    %2857 = vst [vmem:[%s8 + $0x1c0] sm:$0xff] %v2034
    %2858 = vst [vmem:[%s8 + $0x1c8] sm:$0xff] %v2036
    %2859 = vst [vmem:[%s8 + $0x1d0] sm:$0xff] %v2038
    %2860 = vst [vmem:[%s8 + $0x1d8] sm:$0xff] %v2040
    %2861 = vst [vmem:[%s8 + $0x1e0] sm:$0xff] %v2042
    %2862 = vst [vmem:[%s8 + $0x1e8] sm:$0xff] %v2044
    %2863 = vst [vmem:[%s8 + $0x1f0] sm:$0xff] %v2046
    %2864 = vst [vmem:[%s8 + $0x1f8] sm:$0xff] %v2048
    %2865 = vst [vmem:[%s8 + $0x200] sm:$0xff] %v2050
    %2866 = vst [vmem:[%s8 + $0x208] sm:$0xff] %v2052
    %2867 = vst [vmem:[%s8 + $0x210] sm:$0xff] %v2054
    %2868 = vst [vmem:[%s8 + $0x218] sm:$0xff] %v2056
    %2869 = vst [vmem:[%s8 + $0x220] sm:$0xff] %v2058
    %2870 = vst [vmem:[%s8 + $0x228] sm:$0xff] %v2060
    %2871 = vst [vmem:[%s8 + $0x230] sm:$0xff] %v2062
    %2872 = vst [vmem:[%s8 + $0x238] sm:$0xff] %v2064
    %2873 = vst [vmem:[%s8 + $0x240] sm:$0xff] %v2066
    %2874 = vst [vmem:[%s8 + $0x248] sm:$0xff] %v2068
    %2875 = vst [vmem:[%s8 + $0x250] sm:$0xff] %v2070
    %2876 = vst [vmem:[%s8 + $0x258] sm:$0xff] %v2072
    %2877 = vst [vmem:[%s8 + $0x260] sm:$0x1f] %v2065
    %2878 = vst [vmem:[%s8 + $0x268] sm:$0x1f] %v2067
    %2879 = vst [vmem:[%s8 + $0x270] sm:$0x1f] %v2069
    %2880 = vst [vmem:[%s8 + $0x278] sm:$0x1f] %v2071
    %2881 = vst [vmem:[%s8 + $0x280] sm:$0xe0] %v2073
    %2882 = vst [vmem:[%s8 + $0x288] sm:$0xe0] %v2074
    %2883 = vst [vmem:[%s8 + $0x290] sm:$0xe0] %v2075
    %2884 = vst [vmem:[%s8 + $0x298] sm:$0xe0] %v2076
    %2885 = vst [vmem:[%s8 + $0x2a0] sm:$0xff] %v2078
    %2886 = vst [vmem:[%s8 + $0x2a8] sm:$0xff] %v2080
    %2887 = vst [vmem:[%s8 + $0x2b0] sm:$0xff] %v2082
    %2888 = vst [vmem:[%s8 + $0x2b8] sm:$0xff] %v2084
    %2889 = vst [vmem:[%s8 + $0x2c0] sm:$0xff] %v2086
    %2890 = vst [vmem:[%s8 + $0x2c8] sm:$0xff] %v2088
    %2891 = vst [vmem:[%s8 + $0x2d0] sm:$0xff] %v2090
    %2892 = vst [vmem:[%s8 + $0x2d8] sm:$0xff] %v2092
    %2893 = vst [vmem:[%s8 + $0x2e0] sm:$0xff] %v2094
    %2894 = vst [vmem:[%s8 + $0x2e8] sm:$0xff] %v2096
    %2895 = vst [vmem:[%s8 + $0x2f0] sm:$0xff] %v2098
    %2896 = vst [vmem:[%s8 + $0x2f8] sm:$0xff] %v2100
    %2897 = vst [vmem:[%s8 + $0x300] sm:$0xff] %v2102
    %2898 = vst [vmem:[%s8 + $0x308] sm:$0xff] %v2104
    %2899 = vst [vmem:[%s8 + $0x310] sm:$0xff] %v2106
    %2900 = vst [vmem:[%s8 + $0x318] sm:$0xff] %v2108
    %2901 = vst [vmem:[%s8 + $0x320] sm:$0xff] %v2110
    %2902 = vst [vmem:[%s8 + $0x328] sm:$0xff] %v2112
    %2903 = vst [vmem:[%s8 + $0x330] sm:$0xff] %v2114
    %2904 = vst [vmem:[%s8 + $0x338] sm:$0xff] %v2116
    %2905 = vst [vmem:[%s8 + $0x340] sm:$0xff] %v2118
    %2906 = vst [vmem:[%s8 + $0x348] sm:$0xff] %v2120
    %2907 = vst [vmem:[%s8 + $0x350] sm:$0xff] %v2122
    %2908 = vst [vmem:[%s8 + $0x358] sm:$0xff] %v2124
    %2909 = vst [vmem:[%s8 + $0x360] sm:$0xff] %v2126
    %2910 = vst [vmem:[%s8 + $0x368] sm:$0xff] %v2128
    %2911 = vst [vmem:[%s8 + $0x370] sm:$0xff] %v2130
    %2912 = vst [vmem:[%s8 + $0x378] sm:$0xff] %v2132
    %2913 = vst [vmem:[%s8 + $0x380] sm:$0xff] %v2134
    %2914 = vst [vmem:[%s8 + $0x388] sm:$0xff] %v2136
    %2915 = vst [vmem:[%s8 + $0x390] sm:$0xff] %v2138
    %2916 = vst [vmem:[%s8 + $0x398] sm:$0xff] %v2140
    %2917 = vst [vmem:[%s8 + $0x3a0] sm:$0x1f] %v2133
    %2918 = vst [vmem:[%s8 + $0x3a8] sm:$0x1f] %v2135
    %2919 = vst [vmem:[%s8 + $0x3b0] sm:$0x1f] %v2137
    %2920 = vst [vmem:[%s8 + $0x3b8] sm:$0x1f] %v2139
    %2921 = vst [vmem:[%s8 + $0x3c0] sm:$0xe0] %v2141
    %2922 = vst [vmem:[%s8 + $0x3c8] sm:$0xe0] %v2142
    %2923 = vst [vmem:[%s8 + $0x3d0] sm:$0xe0] %v2143
    %2924 = vst [vmem:[%s8 + $0x3d8] sm:$0xe0] %v2144
    %2925 = vst [vmem:[%s8 + $0x3e0] sm:$0xff] %v2146
    %2926 = vst [vmem:[%s8 + $0x3e8] sm:$0xff] %v2148
    %2927 = vst [vmem:[%s8 + $0x3f0] sm:$0xff] %v2150
    %2928 = vst [vmem:[%s8 + $0x3f8] sm:$0xff] %v2152
    %2929 = vst [vmem:[%s8 + $0x400] sm:$0xff] %v2154
    %2930 = vst [vmem:[%s8 + $0x408] sm:$0xff] %v2156
    %2931 = vst [vmem:[%s8 + $0x410] sm:$0xff] %v2158
    %2932 = vst [vmem:[%s8 + $0x418] sm:$0xff] %v2160
    %2933 = vst [vmem:[%s8 + $0x420] sm:$0xff] %v2162
    %2934 = vst [vmem:[%s8 + $0x428] sm:$0xff] %v2164
    %2935 = vst [vmem:[%s8 + $0x430] sm:$0xff] %v2166
    %2936 = vst [vmem:[%s8 + $0x438] sm:$0xff] %v2168
    %2937 = vst [vmem:[%s8 + $0x440] sm:$0xff] %v2170
    %2938 = vst [vmem:[%s8 + $0x448] sm:$0xff] %v2172
    %2939 = vst [vmem:[%s8 + $0x450] sm:$0xff] %v2174
    %2940 = vst [vmem:[%s8 + $0x458] sm:$0xff] %v2176
    %2941 = vst [vmem:[%s8 + $0x460] sm:$0xff] %v2178
    %2942 = vst [vmem:[%s8 + $0x468] sm:$0xff] %v2180
    %2943 = vst [vmem:[%s8 + $0x470] sm:$0xff] %v2182
    %2944 = vst [vmem:[%s8 + $0x478] sm:$0xff] %v2184
    %2945 = vst [vmem:[%s8 + $0x480] sm:$0xff] %v2186
    %2946 = vst [vmem:[%s8 + $0x488] sm:$0xff] %v2188
    %2947 = vst [vmem:[%s8 + $0x490] sm:$0xff] %v2190
    %2948 = vst [vmem:[%s8 + $0x498] sm:$0xff] %v2192
    %2949 = vst [vmem:[%s8 + $0x4a0] sm:$0xff] %v2194
    %2950 = vst [vmem:[%s8 + $0x4a8] sm:$0xff] %v2196
    %2951 = vst [vmem:[%s8 + $0x4b0] sm:$0xff] %v2198
    %2952 = vst [vmem:[%s8 + $0x4b8] sm:$0xff] %v2200
    %2953 = vst [vmem:[%s8 + $0x4c0] sm:$0xff] %v2202
    %2954 = vst [vmem:[%s8 + $0x4c8] sm:$0xff] %v2204
    %2955 = vst [vmem:[%s8 + $0x4d0] sm:$0xff] %v2206
    %2956 = vst [vmem:[%s8 + $0x4d8] sm:$0xff] %v2208
    %2957 = vst [vmem:[%s8 + $0x4e0] sm:$0x1f] %v2201
    %2958 = vst [vmem:[%s8 + $0x4e8] sm:$0x1f] %v2203
    %2959 = vst [vmem:[%s8 + $0x4f0] sm:$0x1f] %v2205
    %2960 = vst [vmem:[%s8 + $0x4f8] sm:$0x1f] %v2207
    %2961 = vst [vmem:[%s8 + $0x500] sm:$0xe0] %v2209
    %2962 = vst [vmem:[%s8 + $0x508] sm:$0xe0] %v2210
    %2963 = vst [vmem:[%s8 + $0x510] sm:$0xe0] %v2211
    %2964 = vst [vmem:[%s8 + $0x518] sm:$0xe0] %v2212
    %2965 = vst [vmem:[%s8 + $0x520] sm:$0xff] %v2214
    %2966 = vst [vmem:[%s8 + $0x528] sm:$0xff] %v2216
    %2967 = vst [vmem:[%s8 + $0x530] sm:$0xff] %v2218
    %2968 = vst [vmem:[%s8 + $0x538] sm:$0xff] %v2220
    %2969 = vst [vmem:[%s8 + $0x540] sm:$0xff] %v2222
    %2970 = vst [vmem:[%s8 + $0x548] sm:$0xff] %v2224
    %2971 = vst [vmem:[%s8 + $0x550] sm:$0xff] %v2226
    %2972 = vst [vmem:[%s8 + $0x558] sm:$0xff] %v2228
    %2973 = vst [vmem:[%s8 + $0x560] sm:$0xff] %v2230
    %2974 = vst [vmem:[%s8 + $0x568] sm:$0xff] %v2232
    %2975 = vst [vmem:[%s8 + $0x570] sm:$0xff] %v2234
    %2976 = vst [vmem:[%s8 + $0x578] sm:$0xff] %v2236
    %2977 = vst [vmem:[%s8 + $0x580] sm:$0xff] %v2238
    %2978 = vst [vmem:[%s8 + $0x588] sm:$0xff] %v2240
    %2979 = vst [vmem:[%s8 + $0x590] sm:$0xff] %v2242
    %2980 = vst [vmem:[%s8 + $0x598] sm:$0xff] %v2244
    %2981 = vst [vmem:[%s8 + $0x5a0] sm:$0xff] %v2246
    %2982 = vst [vmem:[%s8 + $0x5a8] sm:$0xff] %v2248
    %2983 = vst [vmem:[%s8 + $0x5b0] sm:$0xff] %v2250
    %2984 = vst [vmem:[%s8 + $0x5b8] sm:$0xff] %v2252
    %2985 = vst [vmem:[%s8 + $0x5c0] sm:$0xff] %v2254
    %2986 = vst [vmem:[%s8 + $0x5c8] sm:$0xff] %v2256
    %2987 = vst [vmem:[%s8 + $0x5d0] sm:$0xff] %v2258
    %2988 = vst [vmem:[%s8 + $0x5d8] sm:$0xff] %v2260
    %2989 = vst [vmem:[%s8 + $0x5e0] sm:$0xff] %v2262
    %2990 = vst [vmem:[%s8 + $0x5e8] sm:$0xff] %v2264
    %2991 = vst [vmem:[%s8 + $0x5f0] sm:$0xff] %v2266
    %2992 = vst [vmem:[%s8 + $0x5f8] sm:$0xff] %v2268
    %2993 = vst [vmem:[%s8 + $0x600] sm:$0xff] %v2270
    %2994 = vst [vmem:[%s8 + $0x608] sm:$0xff] %v2272
    %2995 = vst [vmem:[%s8 + $0x610] sm:$0xff] %v2274
    %2996 = vst [vmem:[%s8 + $0x618] sm:$0xff] %v2276
    %2997 = vst [vmem:[%s8 + $0x620] sm:$0x1f] %v2269
    %2998 = vst [vmem:[%s8 + $0x628] sm:$0x1f] %v2271
    %2999 = vst [vmem:[%s8 + $0x630] sm:$0x1f] %v2273
    %3000 = vst [vmem:[%s8 + $0x638] sm:$0x1f] %v2275
    %3001 = vst [vmem:[%s8 + $0x640] sm:$0xe0] %v2277
    %3002 = vst [vmem:[%s8 + $0x648] sm:$0xe0] %v2278
    %3003 = vst [vmem:[%s8 + $0x650] sm:$0xe0] %v2279
    %3004 = vst [vmem:[%s8 + $0x658] sm:$0xe0] %v2280
    %3005 = vst [vmem:[%s8 + $0x660] sm:$0xff] %v2282
    %3006 = vst [vmem:[%s8 + $0x668] sm:$0xff] %v2284
    %3007 = vst [vmem:[%s8 + $0x670] sm:$0xff] %v2286
    %3008 = vst [vmem:[%s8 + $0x678] sm:$0xff] %v2288
    %3009 = vst [vmem:[%s8 + $0x680] sm:$0xff] %v2290
    %3010 = vst [vmem:[%s8 + $0x688] sm:$0xff] %v2292
    %3011 = vst [vmem:[%s8 + $0x690] sm:$0xff] %v2294
    %3012 = vst [vmem:[%s8 + $0x698] sm:$0xff] %v2296
    %3013 = vst [vmem:[%s8 + $0x6a0] sm:$0xff] %v2298
    %3014 = vst [vmem:[%s8 + $0x6a8] sm:$0xff] %v2300
    %3015 = vst [vmem:[%s8 + $0x6b0] sm:$0xff] %v2302
    %3016 = vst [vmem:[%s8 + $0x6b8] sm:$0xff] %v2304
    %3017 = vst [vmem:[%s8 + $0x6c0] sm:$0xff] %v2306
    %3018 = vst [vmem:[%s8 + $0x6c8] sm:$0xff] %v2308
    %3019 = vst [vmem:[%s8 + $0x6d0] sm:$0xff] %v2310
    %3020 = vst [vmem:[%s8 + $0x6d8] sm:$0xff] %v2312
    %3021 = vst [vmem:[%s8 + $0x6e0] sm:$0xff] %v2314
    %3022 = vst [vmem:[%s8 + $0x6e8] sm:$0xff] %v2316
    %3023 = vst [vmem:[%s8 + $0x6f0] sm:$0xff] %v2318
    %3024 = vst [vmem:[%s8 + $0x6f8] sm:$0xff] %v2320
    %3025 = vst [vmem:[%s8 + $0x700] sm:$0xff] %v2322
    %3026 = vst [vmem:[%s8 + $0x708] sm:$0xff] %v2324
    %3027 = vst [vmem:[%s8 + $0x710] sm:$0xff] %v2326
    %3028 = vst [vmem:[%s8 + $0x718] sm:$0xff] %v2328
    %3029 = vst [vmem:[%s8 + $0x720] sm:$0xff] %v2330
    %3030 = vst [vmem:[%s8 + $0x728] sm:$0xff] %v2332
    %3031 = vst [vmem:[%s8 + $0x730] sm:$0xff] %v2334
    %3032 = vst [vmem:[%s8 + $0x738] sm:$0xff] %v2336
    %3033 = vst [vmem:[%s8 + $0x740] sm:$0xff] %v2338
    %3034 = vst [vmem:[%s8 + $0x748] sm:$0xff] %v2340
    %3035 = vst [vmem:[%s8 + $0x750] sm:$0xff] %v2342
    %3036 = vst [vmem:[%s8 + $0x758] sm:$0xff] %v2344
    %3037 = vst [vmem:[%s8 + $0x760] sm:$0x1f] %v2337
    %3038 = vst [vmem:[%s8 + $0x768] sm:$0x1f] %v2339
    %3039 = vst [vmem:[%s8 + $0x770] sm:$0x1f] %v2341
    %3040 = vst [vmem:[%s8 + $0x778] sm:$0x1f] %v2343
    %3041 = vst [vmem:[%s8 + $0x780] sm:$0xe0] %v2345
    %3042 = vst [vmem:[%s8 + $0x788] sm:$0xe0] %v2346
    %3043 = vst [vmem:[%s8 + $0x790] sm:$0xe0] %v2347
    %3044 = vst [vmem:[%s8 + $0x798] sm:$0xe0] %v2348
    %3045 = vst [vmem:[%s8 + $0x7a0] sm:$0xff] %v2350
    %3046 = vst [vmem:[%s8 + $0x7a8] sm:$0xff] %v2352
    %3047 = vst [vmem:[%s8 + $0x7b0] sm:$0xff] %v2354
    %3048 = vst [vmem:[%s8 + $0x7b8] sm:$0xff] %v2356
    %3049 = vst [vmem:[%s8 + $0x7c0] sm:$0xff] %v2358
    %3050 = vst [vmem:[%s8 + $0x7c8] sm:$0xff] %v2360
    %3051 = vst [vmem:[%s8 + $0x7d0] sm:$0xff] %v2362
    %3052 = vst [vmem:[%s8 + $0x7d8] sm:$0xff] %v2364
    %3053 = vst [vmem:[%s8 + $0x7e0] sm:$0xff] %v2366
    %3054 = vst [vmem:[%s8 + $0x7e8] sm:$0xff] %v2368
    %3055 = vst [vmem:[%s8 + $0x7f0] sm:$0xff] %v2370
    %3056 = vst [vmem:[%s8 + $0x7f8] sm:$0xff] %v2372
    %3057 = vst [vmem:[%s8 + $0x800] sm:$0xff] %v2374
    %3058 = vst [vmem:[%s8 + $0x808] sm:$0xff] %v2376
    %3059 = vst [vmem:[%s8 + $0x810] sm:$0xff] %v2378
    %3060 = vst [vmem:[%s8 + $0x818] sm:$0xff] %v2380
    %3061 = vst [vmem:[%s8 + $0x820] sm:$0xff] %v2382
    %3062 = vst [vmem:[%s8 + $0x828] sm:$0xff] %v2384
    %3063 = vst [vmem:[%s8 + $0x830] sm:$0xff] %v2386
    %3064 = vst [vmem:[%s8 + $0x838] sm:$0xff] %v2388
    %3065 = vst [vmem:[%s8 + $0x840] sm:$0xff] %v2390
    %3066 = vst [vmem:[%s8 + $0x848] sm:$0xff] %v2392
    %3067 = vst [vmem:[%s8 + $0x850] sm:$0xff] %v2394
    %3068 = vst [vmem:[%s8 + $0x858] sm:$0xff] %v2396
    %3069 = vst [vmem:[%s8 + $0x860] sm:$0xff] %v2398
    %3070 = vst [vmem:[%s8 + $0x868] sm:$0xff] %v2400
    %3071 = vst [vmem:[%s8 + $0x870] sm:$0xff] %v2402
    %3072 = vst [vmem:[%s8 + $0x878] sm:$0xff] %v2404
    %3073 = vst [vmem:[%s8 + $0x880] sm:$0xff] %v2406
    %3074 = vst [vmem:[%s8 + $0x888] sm:$0xff] %v2408
    %3075 = vst [vmem:[%s8 + $0x890] sm:$0xff] %v2410
    %3076 = vst [vmem:[%s8 + $0x898] sm:$0xff] %v2412
    %3077 = vst [vmem:[%s8 + $0x8a0] sm:$0x1f] %v2405
    %3078 = vst [vmem:[%s8 + $0x8a8] sm:$0x1f] %v2407
    %3079 = vst [vmem:[%s8 + $0x8b0] sm:$0x1f] %v2409
    %3080 = vst [vmem:[%s8 + $0x8b8] sm:$0x1f] %v2411
    %3081 = vst [vmem:[%s8 + $0x8c0] sm:$0xe0] %v2413
    %3082 = vst [vmem:[%s8 + $0x8c8] sm:$0xe0] %v2414
    %3083 = vst [vmem:[%s8 + $0x8d0] sm:$0xe0] %v2415
    %3084 = vst [vmem:[%s8 + $0x8d8] sm:$0xe0] %v2416
    %3085 = vst [vmem:[%s8 + $0x8e0] sm:$0xff] %v2418
    %3086 = vst [vmem:[%s8 + $0x8e8] sm:$0xff] %v2420
    %3087 = vst [vmem:[%s8 + $0x8f0] sm:$0xff] %v2422
    %3088 = vst [vmem:[%s8 + $0x8f8] sm:$0xff] %v2424
    %3089 = vst [vmem:[%s8 + $0x900] sm:$0xff] %v2426
    %3090 = vst [vmem:[%s8 + $0x908] sm:$0xff] %v2428
    %3091 = vst [vmem:[%s8 + $0x910] sm:$0xff] %v2430
    %3092 = vst [vmem:[%s8 + $0x918] sm:$0xff] %v2432
    %3093 = vst [vmem:[%s8 + $0x920] sm:$0xff] %v2434
    %3094 = vst [vmem:[%s8 + $0x928] sm:$0xff] %v2436
    %3095 = vst [vmem:[%s8 + $0x930] sm:$0xff] %v2438
    %3096 = vst [vmem:[%s8 + $0x938] sm:$0xff] %v2440
    %3097 = vst [vmem:[%s8 + $0x940] sm:$0xff] %v2442
    %3098 = vst [vmem:[%s8 + $0x948] sm:$0xff] %v2444
    %3099 = vst [vmem:[%s8 + $0x950] sm:$0xff] %v2446
    %3100 = vst [vmem:[%s8 + $0x958] sm:$0xff] %v2448
    %3101 = vst [vmem:[%s8 + $0x960] sm:$0xff] %v2450
    %3102 = vst [vmem:[%s8 + $0x968] sm:$0xff] %v2452
    %3103 = vst [vmem:[%s8 + $0x970] sm:$0xff] %v2454
    %3104 = vst [vmem:[%s8 + $0x978] sm:$0xff] %v2456
    %3105 = vst [vmem:[%s8 + $0x980] sm:$0xff] %v2458
    %3106 = vst [vmem:[%s8 + $0x988] sm:$0xff] %v2460
    %3107 = vst [vmem:[%s8 + $0x990] sm:$0xff] %v2462
    %3108 = vst [vmem:[%s8 + $0x998] sm:$0xff] %v2464
    %3109 = vst [vmem:[%s8 + $0x9a0] sm:$0xff] %v2466
    %3110 = vst [vmem:[%s8 + $0x9a8] sm:$0xff] %v2468
    %3111 = vst [vmem:[%s8 + $0x9b0] sm:$0xff] %v2470
    %3112 = vst [vmem:[%s8 + $0x9b8] sm:$0xff] %v2472
    %3113 = vst [vmem:[%s8 + $0x9c0] sm:$0xff] %v2474
    %3114 = vst [vmem:[%s8 + $0x9c8] sm:$0xff] %v2476
    %3115 = vst [vmem:[%s8 + $0x9d0] sm:$0xff] %v2478
    %3116 = vst [vmem:[%s8 + $0x9d8] sm:$0xff] %v2480
    %3117 = vst [vmem:[%s8 + $0x9e0] sm:$0x1f] %v2473
    %3118 = vst [vmem:[%s8 + $0x9e8] sm:$0x1f] %v2475
    %3119 = vst [vmem:[%s8 + $0x9f0] sm:$0x1f] %v2477
    %3120 = vst [vmem:[%s8 + $0x9f8] sm:$0x1f] %v2479
    // Predicated region
    $region66: #{prompt_learner_forward.1} parent=1 // pred_check
      _
    $region67: #{prompt_learner_forward.1} parent=1 // pred_check_branch
      %3122 = sbr.rel (0) target = $region69
    $region68: #{prompt_learner_forward.1} parent=1 // pred_region
      _
    $region69: #{prompt_learner_forward.1} parent=1 // pred_fallthru
      _
    // Predicated region
    $region70: #{prompt_learner_forward.1} parent=1 // pred_check
      _
    $region71: #{prompt_learner_forward.1} parent=1 // pred_check_branch
      %3124 = sbr.rel (0) target = $region73
    $region72: #{prompt_learner_forward.1} parent=1 // pred_region
      _
    $region73: #{prompt_learner_forward.1} parent=1 // pred_fallthru
      _
    // Predicated region
    $region74: #{prompt_learner_forward.1} parent=1 // pred_check
      _
    $region75: #{prompt_learner_forward.1} parent=1 // pred_check_branch
      %3126 = sbr.rel (0) target = $region77
    $region76: #{prompt_learner_forward.1} parent=1 // pred_region
      _
    $region77: #{prompt_learner_forward.1} parent=1 // pred_fallthru
      _
    // Predicated region
    $region78: #{prompt_learner_forward.1} parent=1 // pred_check
      _
    $region79: #{prompt_learner_forward.1} parent=1 // pred_check_branch
      %3128 = sbr.rel (0) target = $region81
    $region80: #{prompt_learner_forward.1} parent=1 // pred_region
      _
    $region81: #{prompt_learner_forward.1} parent=1 // pred_fallthru
      _
    %3129 = vsyncpa [#allocation3], 1
    %3130 = vsyncpa [#allocation5], 1
    %3131 = vsyncpa [#allocation8], 1
    %3132 = vsyncpa [#allocation11], 1
    %3133 = vsyncpa [#allocation14], 1

</llo_original>
